<compile_context>
chip_gen: v7x
topology: tpu7x:2x2x1
jax: 0.10.0
libtpu: 0.0.40
codegen_flags: <defaults>
</compile_context>

<pallas_src>
import jax
import jax.numpy as jnp
from jax.experimental import pallas as pl
from jax.experimental.pallas import tpu as pltpu

EPS = 0.1  # nn.LayerNorm(hidden_dim, eps=0.1)


def _swish(x):
    return x * jax.nn.sigmoid(x)


def _layernorm(h, gamma, beta, eps):
    mu = jnp.mean(h, axis=-1, keepdims=True)
    var = jnp.mean(jnp.square(h - mu), axis=-1, keepdims=True)
    return (h - mu) * jax.lax.rsqrt(var + eps) * gamma + beta


def _make_encoder_kernel(thresh, inv_keep, apply_dropout):
    """thresh / inv_keep are compile-time constants baked into the kernel."""

    def encoder_kernel(x_ref, rbits_ref,
                       w1, b1, g1, be1,
                       w2, b2, g2, be2,
                       w3, b3, g3, be3,
                       w4, b4, g4, be4,
                       w5, b5, g5, be5,
                       wh, bh,
                       out_ref):
        x = x_ref[...].astype(jnp.float32)

        # x = x / ||x||_2 per row (no eps, exactly as the torch code; an
        # all-zero row produces NaN just like the reference).
        x = x * jax.lax.rsqrt(jnp.sum(x * x, axis=-1, keepdims=True))

        if apply_dropout:
            # Inverted dropout: keep iff 31-bit uniform int < thresh, then
            # scale by 1/keep (both precomputed on the host).
            # TODO(synk): RNG stream differs from torch F.dropout (same
            # distribution, not bit-identical).
            mask = (rbits_ref[...] < jnp.int32(thresh)).astype(jnp.float32)
            x = x * (mask * jnp.float32(inv_keep))

        def lin(h, w_ref, b_ref):
            return jnp.dot(h, w_ref[...],
                           preferred_element_type=jnp.float32) + b_ref[...]

        h1 = _layernorm(_swish(lin(x, w1, b1)), g1[...], be1[...], EPS)
        s1 = h1
        h2 = _layernorm(_swish(lin(h1, w2, b2) + s1), g2[...], be2[...], EPS)
        s2 = s1 + h2
        h3 = _layernorm(_swish(lin(h2, w3, b3) + s2), g3[...], be3[...], EPS)
        s3 = s2 + h3
        h4 = _layernorm(_swish(lin(h3, w4, b4) + s3), g4[...], be4[...], EPS)
        s4 = s3 + h4

        # fc5(h4) is reused for h5, h6 and h7 in the reference.
        base = lin(h4, w5, b5) + s4
        h5 = _layernorm(_swish(base), g5[...], be5[...], EPS)
        t6 = base + h5
        h6 = _layernorm(_swish(t6), g5[...], be5[...], EPS)
        h7 = _layernorm(_swish(t6 + h6), g5[...], be5[...], EPS)

        # Fused mu/logvar head: one MXU pass, one lane-dense store.
        out_ref[...] = lin(h7, wh, bh).astype(out_ref.dtype)

    return encoder_kernel


PARAM_ORDER = (
    "w1", "b1", "g1", "be1",
    "w2", "b2", "g2", "be2",
    "w3", "b3", "g3", "be3",
    "w4", "b4", "g4", "be4",
    "w5", "b5", "g5", "be5",
)


def _pick_tile_b(B):
    # Large tiles amortize per-grid-step overhead; keep a multiple of 8
    # (f32 sublane).  Falls back to the full batch for tiny / odd B.
    for t in (512, 256, 128, 64, 32, 16, 8):
        if B >= t and B % t == 0:
            return t
    return B


def encoder_forward(params, x, dropout_rate, seed, training=True):
    B, input_dim = x.shape
    hidden_dim = params["w1"].shape[1]
    latent_dim = params["wmu"].shape[1]

    # Fused mu / logvar head weights: (hidden, 2*latent).
    whead = jnp.concatenate([params["wmu"], params["wlv"]], axis=1)
    bhead = jnp.concatenate([params["bmu"], params["blv"]], axis=1)

    rate = float(dropout_rate)
    apply_dropout = bool(training) and rate > 0.0
    if apply_dropout and rate >= 1.0:
        raise ValueError("dropout_rate must be < 1.0 in training mode")
    keep = 1.0 - rate
    thresh = min(int(keep * float(2 ** 31)), 2 ** 31 - 1) if apply_dropout else 0
    inv_keep = (1.0 / keep) if apply_dropout else 1.0

    if apply_dropout:
        bits = jax.random.bits(jax.random.PRNGKey(seed), (B, input_dim),
                               dtype=jnp.uint32)
        rbits = (bits >> 1).astype(jnp.int32)          # 31-bit uniform ints
    else:
        rbits = jnp.zeros((B, input_dim), jnp.int32)   # unused by the kernel

    tile_b = _pick_tile_b(B)
    grid = (B // tile_b,)

    def tiled(shape):           # blocked along batch
        return pl.BlockSpec(shape, lambda i: (i, 0))

    def resident(arr):          # weights/biases stay put across grid steps
        nd = arr.ndim
        return pl.BlockSpec(arr.shape, lambda i: (0,) * nd)

    ordered = [params[k] for k in PARAM_ORDER] + [whead, bhead]
    in_specs = [tiled((tile_b, input_dim)), tiled((tile_b, input_dim))] + \
               [resident(a) for a in ordered]

    out = pl.pallas_call(
        _make_encoder_kernel(thresh, inv_keep, apply_dropout),
        out_shape=jax.ShapeDtypeStruct((B, 2 * latent_dim), jnp.float32),
        grid=grid,
        in_specs=in_specs,
        out_specs=tiled((tile_b, 2 * latent_dim)),
        compiler_params=pltpu.CompilerParams(
            dimension_semantics=("parallel",)),
    )(x, rbits, *ordered)

    return out[:, :latent_dim], out[:, latent_dim:]


def init_params(key, input_dim, hidden_dim, latent_dim):
    """Deterministic torch-Linear-style init (uniform +-1/sqrt(fan_in))."""
    def linear(k, fan_in, fan_out):
        kw, kb = jax.random.split(k)
        bound = 1.0 / (fan_in ** 0.5)
        w = jax.random.uniform(kw, (fan_in, fan_out), jnp.float32, -bound, bound)
        b = jax.random.uniform(kb, (1, fan_out), jnp.float32, -bound, bound)
        return w, b

    keys = jax.random.split(key, 10)
    p = {}
    p["w1"], p["b1"] = linear(keys[0], input_dim, hidden_dim)
    for i, k in zip(range(2, 6), keys[1:5]):
        p[f"w{i}"], p[f"b{i}"] = linear(k, hidden_dim, hidden_dim)
    for i in range(1, 6):
        p[f"g{i}"] = jnp.ones((1, hidden_dim), jnp.float32)
        p[f"be{i}"] = jnp.zeros((1, hidden_dim), jnp.float32)
    p["wmu"], p["bmu"] = linear(keys[5], hidden_dim, latent_dim)
    p["wlv"], p["blv"] = linear(keys[6], hidden_dim, latent_dim)
    # fc6/fc7 + ln6/ln7 exist in __init__ but are never used by forward();
    # initialized here only for shape fidelity (not passed to the kernel).
    _w6, _b6 = linear(keys[7], hidden_dim, hidden_dim)
    _w7, _b7 = linear(keys[8], hidden_dim, hidden_dim)
    return p


if __name__ == "__main__":
    key = jax.random.PRNGKey(0)
    kx, kp = jax.random.split(key)

    B, input_dim, hidden_dim, latent_dim = 8, 32, 32, 16
    x = jax.random.normal(kx, (B, input_dim), dtype=jnp.float32)
    params = init_params(kp, input_dim, hidden_dim, latent_dim)

    mu, logvar = encoder_forward(params, x, dropout_rate=0.1, seed=0)
    jax.block_until_ready((mu, logvar))

    assert mu.shape == (B, latent_dim) and logvar.shape == (B, latent_dim)
    assert bool(jnp.all(jnp.isfinite(mu))) and bool(jnp.all(jnp.isfinite(logvar)))
    print("KERNEL_OK")
</pallas_src>

<mosaic_0001>
module attributes {stable_mosaic.version = 11 : i64} {
  func.func @encoder_kernel(%arg0: i32, %arg1: memref<8x32xf32, #tpu.memory_space<vmem>>, %arg2: memref<8x32xi32, #tpu.memory_space<vmem>>, %arg3: memref<32x32xf32, #tpu.memory_space<vmem>>, %arg4: memref<1x32xf32, #tpu.memory_space<vmem>>, %arg5: memref<1x32xf32, #tpu.memory_space<vmem>>, %arg6: memref<1x32xf32, #tpu.memory_space<vmem>>, %arg7: memref<32x32xf32, #tpu.memory_space<vmem>>, %arg8: memref<1x32xf32, #tpu.memory_space<vmem>>, %arg9: memref<1x32xf32, #tpu.memory_space<vmem>>, %arg10: memref<1x32xf32, #tpu.memory_space<vmem>>, %arg11: memref<32x32xf32, #tpu.memory_space<vmem>>, %arg12: memref<1x32xf32, #tpu.memory_space<vmem>>, %arg13: memref<1x32xf32, #tpu.memory_space<vmem>>, %arg14: memref<1x32xf32, #tpu.memory_space<vmem>>, %arg15: memref<32x32xf32, #tpu.memory_space<vmem>>, %arg16: memref<1x32xf32, #tpu.memory_space<vmem>>, %arg17: memref<1x32xf32, #tpu.memory_space<vmem>>, %arg18: memref<1x32xf32, #tpu.memory_space<vmem>>, %arg19: memref<32x32xf32, #tpu.memory_space<vmem>>, %arg20: memref<1x32xf32, #tpu.memory_space<vmem>>, %arg21: memref<1x32xf32, #tpu.memory_space<vmem>>, %arg22: memref<1x32xf32, #tpu.memory_space<vmem>>, %arg23: memref<32x32xf32, #tpu.memory_space<vmem>>, %arg24: memref<1x32xf32, #tpu.memory_space<vmem>>, %arg25: memref<8x32xf32, #tpu.memory_space<vmem>>) attributes {dimension_semantics = [#tpu.dimension_semantics<parallel>], iteration_bounds = array<i64: 1>, scalar_prefetch = 0 : i64, scratch_operands = 0 : i64, tpu.core_type = #tpu.core_type<tc>, window_params = [{transform_indices = @transform_0, window_bounds = array<i64: 8, 32>}, {transform_indices = @transform_1, window_bounds = array<i64: 8, 32>}, {pipeline_mode = #tpu.pipeline_mode<synchronous>, transform_indices = @transform_2, window_bounds = array<i64: 32, 32>}, {pipeline_mode = #tpu.pipeline_mode<synchronous>, transform_indices = @transform_3, window_bounds = array<i64: 1, 32>}, {pipeline_mode = #tpu.pipeline_mode<synchronous>, transform_indices = @transform_4, window_bounds = array<i64: 1, 32>}, {pipeline_mode = #tpu.pipeline_mode<synchronous>, transform_indices = @transform_5, window_bounds = array<i64: 1, 32>}, {pipeline_mode = #tpu.pipeline_mode<synchronous>, transform_indices = @transform_6, window_bounds = array<i64: 32, 32>}, {pipeline_mode = #tpu.pipeline_mode<synchronous>, transform_indices = @transform_7, window_bounds = array<i64: 1, 32>}, {pipeline_mode = #tpu.pipeline_mode<synchronous>, transform_indices = @transform_8, window_bounds = array<i64: 1, 32>}, {pipeline_mode = #tpu.pipeline_mode<synchronous>, transform_indices = @transform_9, window_bounds = array<i64: 1, 32>}, {pipeline_mode = #tpu.pipeline_mode<synchronous>, transform_indices = @transform_10, window_bounds = array<i64: 32, 32>}, {pipeline_mode = #tpu.pipeline_mode<synchronous>, transform_indices = @transform_11, window_bounds = array<i64: 1, 32>}, {pipeline_mode = #tpu.pipeline_mode<synchronous>, transform_indices = @transform_12, window_bounds = array<i64: 1, 32>}, {pipeline_mode = #tpu.pipeline_mode<synchronous>, transform_indices = @transform_13, window_bounds = array<i64: 1, 32>}, {pipeline_mode = #tpu.pipeline_mode<synchronous>, transform_indices = @transform_14, window_bounds = array<i64: 32, 32>}, {pipeline_mode = #tpu.pipeline_mode<synchronous>, transform_indices = @transform_15, window_bounds = array<i64: 1, 32>}, {pipeline_mode = #tpu.pipeline_mode<synchronous>, transform_indices = @transform_16, window_bounds = array<i64: 1, 32>}, {pipeline_mode = #tpu.pipeline_mode<synchronous>, transform_indices = @transform_17, window_bounds = array<i64: 1, 32>}, {pipeline_mode = #tpu.pipeline_mode<synchronous>, transform_indices = @transform_18, window_bounds = array<i64: 32, 32>}, {pipeline_mode = #tpu.pipeline_mode<synchronous>, transform_indices = @transform_19, window_bounds = array<i64: 1, 32>}, {pipeline_mode = #tpu.pipeline_mode<synchronous>, transform_indices = @transform_20, window_bounds = array<i64: 1, 32>}, {pipeline_mode = #tpu.pipeline_mode<synchronous>, transform_indices = @transform_21, window_bounds = array<i64: 1, 32>}, {pipeline_mode = #tpu.pipeline_mode<synchronous>, transform_indices = @transform_22, window_bounds = array<i64: 32, 32>}, {pipeline_mode = #tpu.pipeline_mode<synchronous>, transform_indices = @transform_23, window_bounds = array<i64: 1, 32>}, {transform_indices = @transform_24, window_bounds = array<i64: 8, 32>}]} {
    %c0 = arith.constant 0 : index
    %c0_0 = arith.constant 0 : index
    %0 = vector.load %arg1[%c0, %c0_0] : memref<8x32xf32, #tpu.memory_space<vmem>>, vector<8x32xf32>
    %1 = arith.mulf %0, %0 : vector<8x32xf32>
    %cst = arith.constant dense<0.000000e+00> : vector<8xf32>
    %2 = vector.multi_reduction <add>, %1, %cst [1] : vector<8x32xf32> to vector<8xf32>
    %3 = vector.shape_cast %2 : vector<8xf32> to vector<8x1xf32>
    %4 = math.rsqrt %3 : vector<8x1xf32>
    %5 = vector.broadcast %4 : vector<8x1xf32> to vector<8x32xf32>
    %6 = arith.mulf %0, %5 : vector<8x32xf32>
    %c0_1 = arith.constant 0 : index
    %c0_2 = arith.constant 0 : index
    %7 = vector.load %arg2[%c0_1, %c0_2] : memref<8x32xi32, #tpu.memory_space<vmem>>, vector<8x32xi32>
    %c1932735283_i32 = arith.constant 1932735283 : i32
    %8 = vector.broadcast %c1932735283_i32 : i32 to vector<8x32xi32>
    %9 = arith.cmpi slt, %7, %8 : vector<8x32xi32>
    %10 = arith.extui %9 : vector<8x32xi1> to vector<8x32xi32>
    %11 = arith.sitofp %10 : vector<8x32xi32> to vector<8x32xf32>
    %cst_3 = arith.constant 1.11111116 : f32
    %12 = vector.broadcast %cst_3 : f32 to vector<8x32xf32>
    %13 = arith.mulf %11, %12 : vector<8x32xf32>
    %14 = arith.mulf %6, %13 : vector<8x32xf32>
    %c0_4 = arith.constant 0 : index
    %c0_5 = arith.constant 0 : index
    %15 = vector.load %arg3[%c0_4, %c0_5] : memref<32x32xf32, #tpu.memory_space<vmem>>, vector<32x32xf32>
    %cst_6 = arith.constant dense<0.000000e+00> : vector<8x32xf32>
    %16 = tpu.matmul %14, %15, %cst_6 {dimension_numbers = #tpu.dot_dimension_numbers<[1], [0], [0], [1], [0, 0, 1, 1], [], []>} : vector<8x32xf32>, vector<32x32xf32>, vector<8x32xf32> -> vector<8x32xf32>
    %c0_7 = arith.constant 0 : index
    %c0_8 = arith.constant 0 : index
    %17 = vector.load %arg4[%c0_7, %c0_8] : memref<1x32xf32, #tpu.memory_space<vmem>>, vector<1x32xf32>
    %18 = vector.broadcast %17 : vector<1x32xf32> to vector<8x32xf32>
    %19 = arith.addf %16, %18 : vector<8x32xf32>
    %20 = arith.negf %19 : vector<8x32xf32>
    %21 = math.exp %20 : vector<8x32xf32>
    %cst_9 = arith.constant 1.000000e+00 : f32
    %22 = vector.broadcast %cst_9 : f32 to vector<8x32xf32>
    %23 = arith.addf %22, %21 : vector<8x32xf32>
    %24 = arith.divf %22, %23 : vector<8x32xf32>
    %25 = arith.mulf %19, %24 : vector<8x32xf32>
    %c0_10 = arith.constant 0 : index
    %c0_11 = arith.constant 0 : index
    %26 = vector.load %arg5[%c0_10, %c0_11] : memref<1x32xf32, #tpu.memory_space<vmem>>, vector<1x32xf32>
    %c0_12 = arith.constant 0 : index
    %c0_13 = arith.constant 0 : index
    %27 = vector.load %arg6[%c0_12, %c0_13] : memref<1x32xf32, #tpu.memory_space<vmem>>, vector<1x32xf32>
    %cst_14 = arith.constant dense<0.000000e+00> : vector<8xf32>
    %28 = vector.multi_reduction <add>, %25, %cst_14 [1] : vector<8x32xf32> to vector<8xf32>
    %29 = vector.shape_cast %28 : vector<8xf32> to vector<8x1xf32>
    %cst_15 = arith.constant 3.200000e+01 : f32
    %30 = vector.broadcast %cst_15 : f32 to vector<8x1xf32>
    %31 = arith.divf %29, %30 : vector<8x1xf32>
    %32 = vector.broadcast %31 : vector<8x1xf32> to vector<8x32xf32>
    %33 = arith.subf %25, %32 : vector<8x32xf32>
    %34 = arith.mulf %33, %33 : vector<8x32xf32>
    %cst_16 = arith.constant dense<0.000000e+00> : vector<8xf32>
    %35 = vector.multi_reduction <add>, %34, %cst_16 [1] : vector<8x32xf32> to vector<8xf32>
    %36 = vector.shape_cast %35 : vector<8xf32> to vector<8x1xf32>
    %cst_17 = arith.constant 3.200000e+01 : f32
    %37 = vector.broadcast %cst_17 : f32 to vector<8x1xf32>
    %38 = arith.divf %36, %37 : vector<8x1xf32>
    %39 = vector.broadcast %31 : vector<8x1xf32> to vector<8x32xf32>
    %40 = arith.subf %25, %39 : vector<8x32xf32>
    %cst_18 = arith.constant 1.000000e-01 : f32
    %41 = vector.broadcast %cst_18 : f32 to vector<8x1xf32>
    %42 = arith.addf %38, %41 : vector<8x1xf32>
    %43 = math.rsqrt %42 : vector<8x1xf32>
    %44 = vector.broadcast %43 : vector<8x1xf32> to vector<8x32xf32>
    %45 = arith.mulf %40, %44 : vector<8x32xf32>
    %46 = vector.broadcast %26 : vector<1x32xf32> to vector<8x32xf32>
    %47 = arith.mulf %45, %46 : vector<8x32xf32>
    %48 = vector.broadcast %27 : vector<1x32xf32> to vector<8x32xf32>
    %49 = arith.addf %47, %48 : vector<8x32xf32>
    %c0_19 = arith.constant 0 : index
    %c0_20 = arith.constant 0 : index
    %50 = vector.load %arg7[%c0_19, %c0_20] : memref<32x32xf32, #tpu.memory_space<vmem>>, vector<32x32xf32>
    %cst_21 = arith.constant dense<0.000000e+00> : vector<8x32xf32>
    %51 = tpu.matmul %49, %50, %cst_21 {dimension_numbers = #tpu.dot_dimension_numbers<[1], [0], [0], [1], [0, 0, 1, 1], [], []>} : vector<8x32xf32>, vector<32x32xf32>, vector<8x32xf32> -> vector<8x32xf32>
    %c0_22 = arith.constant 0 : index
    %c0_23 = arith.constant 0 : index
    %52 = vector.load %arg8[%c0_22, %c0_23] : memref<1x32xf32, #tpu.memory_space<vmem>>, vector<1x32xf32>
    %53 = vector.broadcast %52 : vector<1x32xf32> to vector<8x32xf32>
    %54 = arith.addf %51, %53 : vector<8x32xf32>
    %55 = arith.addf %54, %49 : vector<8x32xf32>
    %56 = arith.negf %55 : vector<8x32xf32>
    %57 = math.exp %56 : vector<8x32xf32>
    %cst_24 = arith.constant 1.000000e+00 : f32
    %58 = vector.broadcast %cst_24 : f32 to vector<8x32xf32>
    %59 = arith.addf %58, %57 : vector<8x32xf32>
    %60 = arith.divf %58, %59 : vector<8x32xf32>
    %61 = arith.mulf %55, %60 : vector<8x32xf32>
    %c0_25 = arith.constant 0 : index
    %c0_26 = arith.constant 0 : index
    %62 = vector.load %arg9[%c0_25, %c0_26] : memref<1x32xf32, #tpu.memory_space<vmem>>, vector<1x32xf32>
    %c0_27 = arith.constant 0 : index
    %c0_28 = arith.constant 0 : index
    %63 = vector.load %arg10[%c0_27, %c0_28] : memref<1x32xf32, #tpu.memory_space<vmem>>, vector<1x32xf32>
    %cst_29 = arith.constant dense<0.000000e+00> : vector<8xf32>
    %64 = vector.multi_reduction <add>, %61, %cst_29 [1] : vector<8x32xf32> to vector<8xf32>
    %65 = vector.shape_cast %64 : vector<8xf32> to vector<8x1xf32>
    %cst_30 = arith.constant 3.200000e+01 : f32
    %66 = vector.broadcast %cst_30 : f32 to vector<8x1xf32>
    %67 = arith.divf %65, %66 : vector<8x1xf32>
    %68 = vector.broadcast %67 : vector<8x1xf32> to vector<8x32xf32>
    %69 = arith.subf %61, %68 : vector<8x32xf32>
    %70 = arith.mulf %69, %69 : vector<8x32xf32>
    %cst_31 = arith.constant dense<0.000000e+00> : vector<8xf32>
    %71 = vector.multi_reduction <add>, %70, %cst_31 [1] : vector<8x32xf32> to vector<8xf32>
    %72 = vector.shape_cast %71 : vector<8xf32> to vector<8x1xf32>
    %cst_32 = arith.constant 3.200000e+01 : f32
    %73 = vector.broadcast %cst_32 : f32 to vector<8x1xf32>
    %74 = arith.divf %72, %73 : vector<8x1xf32>
    %75 = vector.broadcast %67 : vector<8x1xf32> to vector<8x32xf32>
    %76 = arith.subf %61, %75 : vector<8x32xf32>
    %cst_33 = arith.constant 1.000000e-01 : f32
    %77 = vector.broadcast %cst_33 : f32 to vector<8x1xf32>
    %78 = arith.addf %74, %77 : vector<8x1xf32>
    %79 = math.rsqrt %78 : vector<8x1xf32>
    %80 = vector.broadcast %79 : vector<8x1xf32> to vector<8x32xf32>
    %81 = arith.mulf %76, %80 : vector<8x32xf32>
    %82 = vector.broadcast %62 : vector<1x32xf32> to vector<8x32xf32>
    %83 = arith.mulf %81, %82 : vector<8x32xf32>
    %84 = vector.broadcast %63 : vector<1x32xf32> to vector<8x32xf32>
    %85 = arith.addf %83, %84 : vector<8x32xf32>
    %86 = arith.addf %49, %85 : vector<8x32xf32>
    %c0_34 = arith.constant 0 : index
    %c0_35 = arith.constant 0 : index
    %87 = vector.load %arg11[%c0_34, %c0_35] : memref<32x32xf32, #tpu.memory_space<vmem>>, vector<32x32xf32>
    %cst_36 = arith.constant dense<0.000000e+00> : vector<8x32xf32>
    %88 = tpu.matmul %85, %87, %cst_36 {dimension_numbers = #tpu.dot_dimension_numbers<[1], [0], [0], [1], [0, 0, 1, 1], [], []>} : vector<8x32xf32>, vector<32x32xf32>, vector<8x32xf32> -> vector<8x32xf32>
    %c0_37 = arith.constant 0 : index
    %c0_38 = arith.constant 0 : index
    %89 = vector.load %arg12[%c0_37, %c0_38] : memref<1x32xf32, #tpu.memory_space<vmem>>, vector<1x32xf32>
    %90 = vector.broadcast %89 : vector<1x32xf32> to vector<8x32xf32>
    %91 = arith.addf %88, %90 : vector<8x32xf32>
    %92 = arith.addf %91, %86 : vector<8x32xf32>
    %93 = arith.negf %92 : vector<8x32xf32>
    %94 = math.exp %93 : vector<8x32xf32>
    %cst_39 = arith.constant 1.000000e+00 : f32
    %95 = vector.broadcast %cst_39 : f32 to vector<8x32xf32>
    %96 = arith.addf %95, %94 : vector<8x32xf32>
    %97 = arith.divf %95, %96 : vector<8x32xf32>
    %98 = arith.mulf %92, %97 : vector<8x32xf32>
    %c0_40 = arith.constant 0 : index
    %c0_41 = arith.constant 0 : index
    %99 = vector.load %arg13[%c0_40, %c0_41] : memref<1x32xf32, #tpu.memory_space<vmem>>, vector<1x32xf32>
    %c0_42 = arith.constant 0 : index
    %c0_43 = arith.constant 0 : index
    %100 = vector.load %arg14[%c0_42, %c0_43] : memref<1x32xf32, #tpu.memory_space<vmem>>, vector<1x32xf32>
    %cst_44 = arith.constant dense<0.000000e+00> : vector<8xf32>
    %101 = vector.multi_reduction <add>, %98, %cst_44 [1] : vector<8x32xf32> to vector<8xf32>
    %102 = vector.shape_cast %101 : vector<8xf32> to vector<8x1xf32>
    %cst_45 = arith.constant 3.200000e+01 : f32
    %103 = vector.broadcast %cst_45 : f32 to vector<8x1xf32>
    %104 = arith.divf %102, %103 : vector<8x1xf32>
    %105 = vector.broadcast %104 : vector<8x1xf32> to vector<8x32xf32>
    %106 = arith.subf %98, %105 : vector<8x32xf32>
    %107 = arith.mulf %106, %106 : vector<8x32xf32>
    %cst_46 = arith.constant dense<0.000000e+00> : vector<8xf32>
    %108 = vector.multi_reduction <add>, %107, %cst_46 [1] : vector<8x32xf32> to vector<8xf32>
    %109 = vector.shape_cast %108 : vector<8xf32> to vector<8x1xf32>
    %cst_47 = arith.constant 3.200000e+01 : f32
    %110 = vector.broadcast %cst_47 : f32 to vector<8x1xf32>
    %111 = arith.divf %109, %110 : vector<8x1xf32>
    %112 = vector.broadcast %104 : vector<8x1xf32> to vector<8x32xf32>
    %113 = arith.subf %98, %112 : vector<8x32xf32>
    %cst_48 = arith.constant 1.000000e-01 : f32
    %114 = vector.broadcast %cst_48 : f32 to vector<8x1xf32>
    %115 = arith.addf %111, %114 : vector<8x1xf32>
    %116 = math.rsqrt %115 : vector<8x1xf32>
    %117 = vector.broadcast %116 : vector<8x1xf32> to vector<8x32xf32>
    %118 = arith.mulf %113, %117 : vector<8x32xf32>
    %119 = vector.broadcast %99 : vector<1x32xf32> to vector<8x32xf32>
    %120 = arith.mulf %118, %119 : vector<8x32xf32>
    %121 = vector.broadcast %100 : vector<1x32xf32> to vector<8x32xf32>
    %122 = arith.addf %120, %121 : vector<8x32xf32>
    %123 = arith.addf %86, %122 : vector<8x32xf32>
    %c0_49 = arith.constant 0 : index
    %c0_50 = arith.constant 0 : index
    %124 = vector.load %arg15[%c0_49, %c0_50] : memref<32x32xf32, #tpu.memory_space<vmem>>, vector<32x32xf32>
    %cst_51 = arith.constant dense<0.000000e+00> : vector<8x32xf32>
    %125 = tpu.matmul %122, %124, %cst_51 {dimension_numbers = #tpu.dot_dimension_numbers<[1], [0], [0], [1], [0, 0, 1, 1], [], []>} : vector<8x32xf32>, vector<32x32xf32>, vector<8x32xf32> -> vector<8x32xf32>
    %c0_52 = arith.constant 0 : index
    %c0_53 = arith.constant 0 : index
    %126 = vector.load %arg16[%c0_52, %c0_53] : memref<1x32xf32, #tpu.memory_space<vmem>>, vector<1x32xf32>
    %127 = vector.broadcast %126 : vector<1x32xf32> to vector<8x32xf32>
    %128 = arith.addf %125, %127 : vector<8x32xf32>
    %129 = arith.addf %128, %123 : vector<8x32xf32>
    %130 = arith.negf %129 : vector<8x32xf32>
    %131 = math.exp %130 : vector<8x32xf32>
    %cst_54 = arith.constant 1.000000e+00 : f32
    %132 = vector.broadcast %cst_54 : f32 to vector<8x32xf32>
    %133 = arith.addf %132, %131 : vector<8x32xf32>
    %134 = arith.divf %132, %133 : vector<8x32xf32>
    %135 = arith.mulf %129, %134 : vector<8x32xf32>
    %c0_55 = arith.constant 0 : index
    %c0_56 = arith.constant 0 : index
    %136 = vector.load %arg17[%c0_55, %c0_56] : memref<1x32xf32, #tpu.memory_space<vmem>>, vector<1x32xf32>
    %c0_57 = arith.constant 0 : index
    %c0_58 = arith.constant 0 : index
    %137 = vector.load %arg18[%c0_57, %c0_58] : memref<1x32xf32, #tpu.memory_space<vmem>>, vector<1x32xf32>
    %cst_59 = arith.constant dense<0.000000e+00> : vector<8xf32>
    %138 = vector.multi_reduction <add>, %135, %cst_59 [1] : vector<8x32xf32> to vector<8xf32>
    %139 = vector.shape_cast %138 : vector<8xf32> to vector<8x1xf32>
    %cst_60 = arith.constant 3.200000e+01 : f32
    %140 = vector.broadcast %cst_60 : f32 to vector<8x1xf32>
    %141 = arith.divf %139, %140 : vector<8x1xf32>
    %142 = vector.broadcast %141 : vector<8x1xf32> to vector<8x32xf32>
    %143 = arith.subf %135, %142 : vector<8x32xf32>
    %144 = arith.mulf %143, %143 : vector<8x32xf32>
    %cst_61 = arith.constant dense<0.000000e+00> : vector<8xf32>
    %145 = vector.multi_reduction <add>, %144, %cst_61 [1] : vector<8x32xf32> to vector<8xf32>
    %146 = vector.shape_cast %145 : vector<8xf32> to vector<8x1xf32>
    %cst_62 = arith.constant 3.200000e+01 : f32
    %147 = vector.broadcast %cst_62 : f32 to vector<8x1xf32>
    %148 = arith.divf %146, %147 : vector<8x1xf32>
    %149 = vector.broadcast %141 : vector<8x1xf32> to vector<8x32xf32>
    %150 = arith.subf %135, %149 : vector<8x32xf32>
    %cst_63 = arith.constant 1.000000e-01 : f32
    %151 = vector.broadcast %cst_63 : f32 to vector<8x1xf32>
    %152 = arith.addf %148, %151 : vector<8x1xf32>
    %153 = math.rsqrt %152 : vector<8x1xf32>
    %154 = vector.broadcast %153 : vector<8x1xf32> to vector<8x32xf32>
    %155 = arith.mulf %150, %154 : vector<8x32xf32>
    %156 = vector.broadcast %136 : vector<1x32xf32> to vector<8x32xf32>
    %157 = arith.mulf %155, %156 : vector<8x32xf32>
    %158 = vector.broadcast %137 : vector<1x32xf32> to vector<8x32xf32>
    %159 = arith.addf %157, %158 : vector<8x32xf32>
    %160 = arith.addf %123, %159 : vector<8x32xf32>
    %c0_64 = arith.constant 0 : index
    %c0_65 = arith.constant 0 : index
    %161 = vector.load %arg19[%c0_64, %c0_65] : memref<32x32xf32, #tpu.memory_space<vmem>>, vector<32x32xf32>
    %cst_66 = arith.constant dense<0.000000e+00> : vector<8x32xf32>
    %162 = tpu.matmul %159, %161, %cst_66 {dimension_numbers = #tpu.dot_dimension_numbers<[1], [0], [0], [1], [0, 0, 1, 1], [], []>} : vector<8x32xf32>, vector<32x32xf32>, vector<8x32xf32> -> vector<8x32xf32>
    %c0_67 = arith.constant 0 : index
    %c0_68 = arith.constant 0 : index
    %163 = vector.load %arg20[%c0_67, %c0_68] : memref<1x32xf32, #tpu.memory_space<vmem>>, vector<1x32xf32>
    %164 = vector.broadcast %163 : vector<1x32xf32> to vector<8x32xf32>
    %165 = arith.addf %162, %164 : vector<8x32xf32>
    %166 = arith.addf %165, %160 : vector<8x32xf32>
    %167 = arith.negf %166 : vector<8x32xf32>
    %168 = math.exp %167 : vector<8x32xf32>
    %cst_69 = arith.constant 1.000000e+00 : f32
    %169 = vector.broadcast %cst_69 : f32 to vector<8x32xf32>
    %170 = arith.addf %169, %168 : vector<8x32xf32>
    %171 = arith.divf %169, %170 : vector<8x32xf32>
    %172 = arith.mulf %166, %171 : vector<8x32xf32>
    %c0_70 = arith.constant 0 : index
    %c0_71 = arith.constant 0 : index
    %173 = vector.load %arg21[%c0_70, %c0_71] : memref<1x32xf32, #tpu.memory_space<vmem>>, vector<1x32xf32>
    %c0_72 = arith.constant 0 : index
    %c0_73 = arith.constant 0 : index
    %174 = vector.load %arg22[%c0_72, %c0_73] : memref<1x32xf32, #tpu.memory_space<vmem>>, vector<1x32xf32>
    %cst_74 = arith.constant dense<0.000000e+00> : vector<8xf32>
    %175 = vector.multi_reduction <add>, %172, %cst_74 [1] : vector<8x32xf32> to vector<8xf32>
    %176 = vector.shape_cast %175 : vector<8xf32> to vector<8x1xf32>
    %cst_75 = arith.constant 3.200000e+01 : f32
    %177 = vector.broadcast %cst_75 : f32 to vector<8x1xf32>
    %178 = arith.divf %176, %177 : vector<8x1xf32>
    %179 = vector.broadcast %178 : vector<8x1xf32> to vector<8x32xf32>
    %180 = arith.subf %172, %179 : vector<8x32xf32>
    %181 = arith.mulf %180, %180 : vector<8x32xf32>
    %cst_76 = arith.constant dense<0.000000e+00> : vector<8xf32>
    %182 = vector.multi_reduction <add>, %181, %cst_76 [1] : vector<8x32xf32> to vector<8xf32>
    %183 = vector.shape_cast %182 : vector<8xf32> to vector<8x1xf32>
    %cst_77 = arith.constant 3.200000e+01 : f32
    %184 = vector.broadcast %cst_77 : f32 to vector<8x1xf32>
    %185 = arith.divf %183, %184 : vector<8x1xf32>
    %186 = vector.broadcast %178 : vector<8x1xf32> to vector<8x32xf32>
    %187 = arith.subf %172, %186 : vector<8x32xf32>
    %cst_78 = arith.constant 1.000000e-01 : f32
    %188 = vector.broadcast %cst_78 : f32 to vector<8x1xf32>
    %189 = arith.addf %185, %188 : vector<8x1xf32>
    %190 = math.rsqrt %189 : vector<8x1xf32>
    %191 = vector.broadcast %190 : vector<8x1xf32> to vector<8x32xf32>
    %192 = arith.mulf %187, %191 : vector<8x32xf32>
    %193 = vector.broadcast %173 : vector<1x32xf32> to vector<8x32xf32>
    %194 = arith.mulf %192, %193 : vector<8x32xf32>
    %195 = vector.broadcast %174 : vector<1x32xf32> to vector<8x32xf32>
    %196 = arith.addf %194, %195 : vector<8x32xf32>
    %197 = arith.addf %166, %196 : vector<8x32xf32>
    %198 = arith.negf %197 : vector<8x32xf32>
    %199 = math.exp %198 : vector<8x32xf32>
    %cst_79 = arith.constant 1.000000e+00 : f32
    %200 = vector.broadcast %cst_79 : f32 to vector<8x32xf32>
    %201 = arith.addf %200, %199 : vector<8x32xf32>
    %202 = arith.divf %200, %201 : vector<8x32xf32>
    %203 = arith.mulf %197, %202 : vector<8x32xf32>
    %c0_80 = arith.constant 0 : index
    %c0_81 = arith.constant 0 : index
    %204 = vector.load %arg21[%c0_80, %c0_81] : memref<1x32xf32, #tpu.memory_space<vmem>>, vector<1x32xf32>
    %c0_82 = arith.constant 0 : index
    %c0_83 = arith.constant 0 : index
    %205 = vector.load %arg22[%c0_82, %c0_83] : memref<1x32xf32, #tpu.memory_space<vmem>>, vector<1x32xf32>
    %cst_84 = arith.constant dense<0.000000e+00> : vector<8xf32>
    %206 = vector.multi_reduction <add>, %203, %cst_84 [1] : vector<8x32xf32> to vector<8xf32>
    %207 = vector.shape_cast %206 : vector<8xf32> to vector<8x1xf32>
    %cst_85 = arith.constant 3.200000e+01 : f32
    %208 = vector.broadcast %cst_85 : f32 to vector<8x1xf32>
    %209 = arith.divf %207, %208 : vector<8x1xf32>
    %210 = vector.broadcast %209 : vector<8x1xf32> to vector<8x32xf32>
    %211 = arith.subf %203, %210 : vector<8x32xf32>
    %212 = arith.mulf %211, %211 : vector<8x32xf32>
    %cst_86 = arith.constant dense<0.000000e+00> : vector<8xf32>
    %213 = vector.multi_reduction <add>, %212, %cst_86 [1] : vector<8x32xf32> to vector<8xf32>
    %214 = vector.shape_cast %213 : vector<8xf32> to vector<8x1xf32>
    %cst_87 = arith.constant 3.200000e+01 : f32
    %215 = vector.broadcast %cst_87 : f32 to vector<8x1xf32>
    %216 = arith.divf %214, %215 : vector<8x1xf32>
    %217 = vector.broadcast %209 : vector<8x1xf32> to vector<8x32xf32>
    %218 = arith.subf %203, %217 : vector<8x32xf32>
    %cst_88 = arith.constant 1.000000e-01 : f32
    %219 = vector.broadcast %cst_88 : f32 to vector<8x1xf32>
    %220 = arith.addf %216, %219 : vector<8x1xf32>
    %221 = math.rsqrt %220 : vector<8x1xf32>
    %222 = vector.broadcast %221 : vector<8x1xf32> to vector<8x32xf32>
    %223 = arith.mulf %218, %222 : vector<8x32xf32>
    %224 = vector.broadcast %204 : vector<1x32xf32> to vector<8x32xf32>
    %225 = arith.mulf %223, %224 : vector<8x32xf32>
    %226 = vector.broadcast %205 : vector<1x32xf32> to vector<8x32xf32>
    %227 = arith.addf %225, %226 : vector<8x32xf32>
    %228 = arith.addf %197, %227 : vector<8x32xf32>
    %229 = arith.negf %228 : vector<8x32xf32>
    %230 = math.exp %229 : vector<8x32xf32>
    %cst_89 = arith.constant 1.000000e+00 : f32
    %231 = vector.broadcast %cst_89 : f32 to vector<8x32xf32>
    %232 = arith.addf %231, %230 : vector<8x32xf32>
    %233 = arith.divf %231, %232 : vector<8x32xf32>
    %234 = arith.mulf %228, %233 : vector<8x32xf32>
    %c0_90 = arith.constant 0 : index
    %c0_91 = arith.constant 0 : index
    %235 = vector.load %arg21[%c0_90, %c0_91] : memref<1x32xf32, #tpu.memory_space<vmem>>, vector<1x32xf32>
    %c0_92 = arith.constant 0 : index
    %c0_93 = arith.constant 0 : index
    %236 = vector.load %arg22[%c0_92, %c0_93] : memref<1x32xf32, #tpu.memory_space<vmem>>, vector<1x32xf32>
    %cst_94 = arith.constant dense<0.000000e+00> : vector<8xf32>
    %237 = vector.multi_reduction <add>, %234, %cst_94 [1] : vector<8x32xf32> to vector<8xf32>
    %238 = vector.shape_cast %237 : vector<8xf32> to vector<8x1xf32>
    %cst_95 = arith.constant 3.200000e+01 : f32
    %239 = vector.broadcast %cst_95 : f32 to vector<8x1xf32>
    %240 = arith.divf %238, %239 : vector<8x1xf32>
    %241 = vector.broadcast %240 : vector<8x1xf32> to vector<8x32xf32>
    %242 = arith.subf %234, %241 : vector<8x32xf32>
    %243 = arith.mulf %242, %242 : vector<8x32xf32>
    %cst_96 = arith.constant dense<0.000000e+00> : vector<8xf32>
    %244 = vector.multi_reduction <add>, %243, %cst_96 [1] : vector<8x32xf32> to vector<8xf32>
    %245 = vector.shape_cast %244 : vector<8xf32> to vector<8x1xf32>
    %cst_97 = arith.constant 3.200000e+01 : f32
    %246 = vector.broadcast %cst_97 : f32 to vector<8x1xf32>
    %247 = arith.divf %245, %246 : vector<8x1xf32>
    %248 = vector.broadcast %240 : vector<8x1xf32> to vector<8x32xf32>
    %249 = arith.subf %234, %248 : vector<8x32xf32>
    %cst_98 = arith.constant 1.000000e-01 : f32
    %250 = vector.broadcast %cst_98 : f32 to vector<8x1xf32>
    %251 = arith.addf %247, %250 : vector<8x1xf32>
    %252 = math.rsqrt %251 : vector<8x1xf32>
    %253 = vector.broadcast %252 : vector<8x1xf32> to vector<8x32xf32>
    %254 = arith.mulf %249, %253 : vector<8x32xf32>
    %255 = vector.broadcast %235 : vector<1x32xf32> to vector<8x32xf32>
    %256 = arith.mulf %254, %255 : vector<8x32xf32>
    %257 = vector.broadcast %236 : vector<1x32xf32> to vector<8x32xf32>
    %258 = arith.addf %256, %257 : vector<8x32xf32>
    %c0_99 = arith.constant 0 : index
    %c0_100 = arith.constant 0 : index
    %259 = vector.load %arg23[%c0_99, %c0_100] : memref<32x32xf32, #tpu.memory_space<vmem>>, vector<32x32xf32>
    %cst_101 = arith.constant dense<0.000000e+00> : vector<8x32xf32>
    %260 = tpu.matmul %258, %259, %cst_101 {dimension_numbers = #tpu.dot_dimension_numbers<[1], [0], [0], [1], [0, 0, 1, 1], [], []>} : vector<8x32xf32>, vector<32x32xf32>, vector<8x32xf32> -> vector<8x32xf32>
    %c0_102 = arith.constant 0 : index
    %c0_103 = arith.constant 0 : index
    %261 = vector.load %arg24[%c0_102, %c0_103] : memref<1x32xf32, #tpu.memory_space<vmem>>, vector<1x32xf32>
    %262 = vector.broadcast %261 : vector<1x32xf32> to vector<8x32xf32>
    %263 = arith.addf %260, %262 : vector<8x32xf32>
    %c0_104 = arith.constant 0 : index
    %c0_105 = arith.constant 0 : index
    %264 = vector.load %arg25[%c0_104, %c0_105] : memref<8x32xf32, #tpu.memory_space<vmem>>, vector<8x32xf32>
    tpu.vector_store %arg25[%c0_104, %c0_105], %263 {strides = array<i32>} : memref<8x32xf32, #tpu.memory_space<vmem>>, vector<8x32xf32>,
    return
  }
  func.func @transform_0(%arg0: i32) -> (i32, i32) {
    %c0_i32 = arith.constant 0 : i32
    %c0_i32_0 = arith.constant 0 : i32
    return %arg0, %c0_i32 : i32, i32
  }
  func.func @transform_1(%arg0: i32) -> (i32, i32) {
    %c0_i32 = arith.constant 0 : i32
    %c0_i32_0 = arith.constant 0 : i32
    return %arg0, %c0_i32 : i32, i32
  }
  func.func @transform_2(%arg0: i32) -> (i32, i32) {
    %c0_i32 = arith.constant 0 : i32
    %c0_i32_0 = arith.constant 0 : i32
    %c0_i32_1 = arith.constant 0 : i32
    return %c0_i32, %c0_i32_0 : i32, i32
  }
  func.func @transform_3(%arg0: i32) -> (i32, i32) {
    %c0_i32 = arith.constant 0 : i32
    %c0_i32_0 = arith.constant 0 : i32
    %c0_i32_1 = arith.constant 0 : i32
    return %c0_i32, %c0_i32_0 : i32, i32
  }
  func.func @transform_4(%arg0: i32) -> (i32, i32) {
    %c0_i32 = arith.constant 0 : i32
    %c0_i32_0 = arith.constant 0 : i32
    %c0_i32_1 = arith.constant 0 : i32
    return %c0_i32, %c0_i32_0 : i32, i32
  }
  func.func @transform_5(%arg0: i32) -> (i32, i32) {
    %c0_i32 = arith.constant 0 : i32
    %c0_i32_0 = arith.constant 0 : i32
    %c0_i32_1 = arith.constant 0 : i32
    return %c0_i32, %c0_i32_0 : i32, i32
  }
  func.func @transform_6(%arg0: i32) -> (i32, i32) {
    %c0_i32 = arith.constant 0 : i32
    %c0_i32_0 = arith.constant 0 : i32
    %c0_i32_1 = arith.constant 0 : i32
    return %c0_i32, %c0_i32_0 : i32, i32
  }
  func.func @transform_7(%arg0: i32) -> (i32, i32) {
    %c0_i32 = arith.constant 0 : i32
    %c0_i32_0 = arith.constant 0 : i32
    %c0_i32_1 = arith.constant 0 : i32
    return %c0_i32, %c0_i32_0 : i32, i32
  }
  func.func @transform_8(%arg0: i32) -> (i32, i32) {
    %c0_i32 = arith.constant 0 : i32
    %c0_i32_0 = arith.constant 0 : i32
    %c0_i32_1 = arith.constant 0 : i32
    return %c0_i32, %c0_i32_0 : i32, i32
  }
  func.func @transform_9(%arg0: i32) -> (i32, i32) {
    %c0_i32 = arith.constant 0 : i32
    %c0_i32_0 = arith.constant 0 : i32
    %c0_i32_1 = arith.constant 0 : i32
    return %c0_i32, %c0_i32_0 : i32, i32
  }
  func.func @transform_10(%arg0: i32) -> (i32, i32) {
    %c0_i32 = arith.constant 0 : i32
    %c0_i32_0 = arith.constant 0 : i32
    %c0_i32_1 = arith.constant 0 : i32
    return %c0_i32, %c0_i32_0 : i32, i32
  }
  func.func @transform_11(%arg0: i32) -> (i32, i32) {
    %c0_i32 = arith.constant 0 : i32
    %c0_i32_0 = arith.constant 0 : i32
    %c0_i32_1 = arith.constant 0 : i32
    return %c0_i32, %c0_i32_0 : i32, i32
  }
  func.func @transform_12(%arg0: i32) -> (i32, i32) {
    %c0_i32 = arith.constant 0 : i32
    %c0_i32_0 = arith.constant 0 : i32
    %c0_i32_1 = arith.constant 0 : i32
    return %c0_i32, %c0_i32_0 : i32, i32
  }
  func.func @transform_13(%arg0: i32) -> (i32, i32) {
    %c0_i32 = arith.constant 0 : i32
    %c0_i32_0 = arith.constant 0 : i32
    %c0_i32_1 = arith.constant 0 : i32
    return %c0_i32, %c0_i32_0 : i32, i32
  }
  func.func @transform_14(%arg0: i32) -> (i32, i32) {
    %c0_i32 = arith.constant 0 : i32
    %c0_i32_0 = arith.constant 0 : i32
    %c0_i32_1 = arith.constant 0 : i32
    return %c0_i32, %c0_i32_0 : i32, i32
  }
  func.func @transform_15(%arg0: i32) -> (i32, i32) {
    %c0_i32 = arith.constant 0 : i32
    %c0_i32_0 = arith.constant 0 : i32
    %c0_i32_1 = arith.constant 0 : i32
    return %c0_i32, %c0_i32_0 : i32, i32
  }
  func.func @transform_16(%arg0: i32) -> (i32, i32) {
    %c0_i32 = arith.constant 0 : i32
    %c0_i32_0 = arith.constant 0 : i32
    %c0_i32_1 = arith.constant 0 : i32
    return %c0_i32, %c0_i32_0 : i32, i32
  }
  func.func @transform_17(%arg0: i32) -> (i32, i32) {
    %c0_i32 = arith.constant 0 : i32
    %c0_i32_0 = arith.constant 0 : i32
    %c0_i32_1 = arith.constant 0 : i32
    return %c0_i32, %c0_i32_0 : i32, i32
  }
  func.func @transform_18(%arg0: i32) -> (i32, i32) {
    %c0_i32 = arith.constant 0 : i32
    %c0_i32_0 = arith.constant 0 : i32
    %c0_i32_1 = arith.constant 0 : i32
    return %c0_i32, %c0_i32_0 : i32, i32
  }
  func.func @transform_19(%arg0: i32) -> (i32, i32) {
    %c0_i32 = arith.constant 0 : i32
    %c0_i32_0 = arith.constant 0 : i32
    %c0_i32_1 = arith.constant 0 : i32
    return %c0_i32, %c0_i32_0 : i32, i32
  }
  func.func @transform_20(%arg0: i32) -> (i32, i32) {
    %c0_i32 = arith.constant 0 : i32
    %c0_i32_0 = arith.constant 0 : i32
    %c0_i32_1 = arith.constant 0 : i32
    return %c0_i32, %c0_i32_0 : i32, i32
  }
  func.func @transform_21(%arg0: i32) -> (i32, i32) {
    %c0_i32 = arith.constant 0 : i32
    %c0_i32_0 = arith.constant 0 : i32
    %c0_i32_1 = arith.constant 0 : i32
    return %c0_i32, %c0_i32_0 : i32, i32
  }
  func.func @transform_22(%arg0: i32) -> (i32, i32) {
    %c0_i32 = arith.constant 0 : i32
    %c0_i32_0 = arith.constant 0 : i32
    %c0_i32_1 = arith.constant 0 : i32
    return %c0_i32, %c0_i32_0 : i32, i32
  }
  func.func @transform_23(%arg0: i32) -> (i32, i32) {
    %c0_i32 = arith.constant 0 : i32
    %c0_i32_0 = arith.constant 0 : i32
    %c0_i32_1 = arith.constant 0 : i32
    return %c0_i32, %c0_i32_0 : i32, i32
  }
  func.func @transform_24(%arg0: i32) -> (i32, i32) {
    %c0_i32 = arith.constant 0 : i32
    %c0_i32_0 = arith.constant 0 : i32
    return %arg0, %c0_i32 : i32, i32
  }
}

</mosaic_0001>

<llo_original>
// kernel: tpu_custom_call.1
$region0: #{tpu_custom_call.1}
  #allocation0 [shape = 'u32[]', space=smem, size = 0x4, offset = 0x4, fixed_abs, tag = 'smem constant byte address 0x4 - core index']
  #allocation1 [shape = 'u32[144,128]{1,0:T(1,128)}', space=vmem, size = 0x12000, scoped, tag = 'internal scratch']
  %s0 = inlined_call_operand.hbm [shape: f32[8,32], index: 0, kind: input, shape index: {}]
  %s1 = inlined_call_operand.hbm [shape: s32[8,32], index: 1, kind: input, shape index: {}]
  %s2 = inlined_call_operand.hbm [shape: f32[32,32], index: 2, kind: input, shape index: {}]
  %s3 = inlined_call_operand.hbm [shape: f32[1,32], index: 3, kind: input, shape index: {}]
  %s4 = inlined_call_operand.hbm [shape: f32[1,32], index: 4, kind: input, shape index: {}]
  %s5 = inlined_call_operand.hbm [shape: f32[1,32], index: 5, kind: input, shape index: {}]
  %s6 = inlined_call_operand.hbm [shape: f32[32,32], index: 6, kind: input, shape index: {}]
  %s7 = inlined_call_operand.hbm [shape: f32[1,32], index: 7, kind: input, shape index: {}]
  %s8 = inlined_call_operand.hbm [shape: f32[1,32], index: 8, kind: input, shape index: {}]
  %s9 = inlined_call_operand.hbm [shape: f32[1,32], index: 9, kind: input, shape index: {}]
  %s10 = inlined_call_operand.vmem [shape: f32[32,32], index: 10, kind: input, shape index: {}]
  %s11 = inlined_call_operand.hbm [shape: f32[1,32], index: 11, kind: input, shape index: {}]
  %s12 = inlined_call_operand.hbm [shape: f32[1,32], index: 12, kind: input, shape index: {}]
  %s13 = inlined_call_operand.hbm [shape: f32[1,32], index: 13, kind: input, shape index: {}]
  %s14 = inlined_call_operand.hbm [shape: f32[32,32], index: 14, kind: input, shape index: {}]
  %s15 = inlined_call_operand.hbm [shape: f32[1,32], index: 15, kind: input, shape index: {}]
  %s16 = inlined_call_operand.hbm [shape: f32[1,32], index: 16, kind: input, shape index: {}]
  %s17 = inlined_call_operand.hbm [shape: f32[1,32], index: 17, kind: input, shape index: {}]
  %s18 = inlined_call_operand.vmem [shape: f32[32,32], index: 18, kind: input, shape index: {}]
  %s19 = inlined_call_operand.vmem [shape: f32[1,32], index: 19, kind: input, shape index: {}]
  %s20 = inlined_call_operand.vmem [shape: f32[1,32], index: 20, kind: input, shape index: {}]
  %s21 = inlined_call_operand.vmem [shape: f32[1,32], index: 21, kind: input, shape index: {}]
  %s22 = inlined_call_operand.hbm [shape: f32[32,32], index: 22, kind: input, shape index: {}]
  %s23 = inlined_call_operand.vmem [shape: f32[1,32], index: 23, kind: input, shape index: {}]
  %s24 = inlined_call_operand.hbm [shape: f32[8,32], index: 24, kind: output, shape index: {}]
  %s25 = sld [smem:[#allocation0]]
  $region178: #{tpu_custom_call.1} parent=0
    _
  %s27 = ssub.s32 1, %s25
  %s28 = scalar_select 0, %s27, %s25
  $region1: #{tpu_custom_call.1} parent=0
    #allocation2 [shape = 'u8[4096]{0}', space=vmem, size = 0x1000, scoped, tag = 'input window, operand 0, single buffered']
    #allocation3 [shape = 's32[1]{0}', space=sflag, size = 0x4, scoped, tag = 'scoped memory for tpu_custom_call.1']
    #allocation4 [shape = 's32[1]{0}', space=sflag, size = 0x4, scoped, tag = 'scoped memory for tpu_custom_call.1']
    #allocation5 [shape = 'u8[4096]{0}', space=vmem, size = 0x1000, scoped, tag = 'input window, operand 1, single buffered']
    #allocation6 [shape = 's32[1]{0}', space=sflag, size = 0x4, scoped, tag = 'scoped memory for tpu_custom_call.1']
    #allocation7 [shape = 'u8[16384]{0}', space=vmem, size = 0x4000, scoped, tag = 'input window, operand 2, single buffered']
    #allocation8 [shape = 'u8[512]{0}', space=vmem, size = 0x400, scoped, tag = 'input window, operand 3, single buffered']
    #allocation9 [shape = 's32[1]{0}', space=sflag, size = 0x4, scoped, tag = 'scoped memory for tpu_custom_call.1']
    #allocation10 [shape = 'u8[512]{0}', space=vmem, size = 0x400, scoped, tag = 'input window, operand 4, single buffered']
    #allocation11 [shape = 'u8[512]{0}', space=vmem, size = 0x400, scoped, tag = 'input window, operand 5, single buffered']
    #allocation12 [shape = 's32[1]{0}', space=sflag, size = 0x4, scoped, tag = 'scoped memory for tpu_custom_call.1']
    #allocation13 [shape = 'u8[16384]{0}', space=vmem, size = 0x4000, scoped, tag = 'input window, operand 6, single buffered']
    #allocation14 [shape = 'u8[512]{0}', space=vmem, size = 0x400, scoped, tag = 'input window, operand 7, single buffered']
    #allocation15 [shape = 's32[1]{0}', space=sflag, size = 0x4, scoped, tag = 'scoped memory for tpu_custom_call.1']
    #allocation16 [shape = 'u8[512]{0}', space=vmem, size = 0x400, scoped, tag = 'input window, operand 8, single buffered']
    #allocation17 [shape = 'u8[512]{0}', space=vmem, size = 0x400, scoped, tag = 'input window, operand 9, single buffered']
    #allocation18 [shape = 's32[1]{0}', space=sflag, size = 0x4, scoped, tag = 'scoped memory for tpu_custom_call.1']
    #allocation19 [shape = 'u8[512]{0}', space=vmem, size = 0x400, scoped, tag = 'input window, operand 11, single buffered']
    #allocation20 [shape = 'u8[512]{0}', space=vmem, size = 0x400, scoped, tag = 'input window, operand 12, single buffered']
    #allocation21 [shape = 's32[1]{0}', space=sflag, size = 0x4, scoped, tag = 'scoped memory for tpu_custom_call.1']
    #allocation22 [shape = 'u8[512]{0}', space=vmem, size = 0x400, scoped, tag = 'input window, operand 13, single buffered']
    #allocation23 [shape = 'u8[16384]{0}', space=vmem, size = 0x4000, scoped, tag = 'input window, operand 14, single buffered']
    #allocation24 [shape = 's32[1]{0}', space=sflag, size = 0x4, scoped, tag = 'scoped memory for tpu_custom_call.1']
    #allocation25 [shape = 'u8[512]{0}', space=vmem, size = 0x400, scoped, tag = 'input window, operand 15, single buffered']
    #allocation26 [shape = 'u8[512]{0}', space=vmem, size = 0x400, scoped, tag = 'input window, operand 16, single buffered']
    #allocation27 [shape = 's32[1]{0}', space=sflag, size = 0x4, scoped, tag = 'scoped memory for tpu_custom_call.1']
    #allocation28 [shape = 'u8[512]{0}', space=vmem, size = 0x400, scoped, tag = 'input window, operand 17, single buffered']
    #allocation29 [shape = 'u8[16384]{0}', space=vmem, size = 0x4000, scoped, tag = 'input window, operand 22, single buffered']
    #allocation30 [shape = 's32[1]{0}', space=sflag, size = 0x4, scoped, tag = 'scoped memory for tpu_custom_call.1']
    #allocation31 [shape = 'u8[4096]{0}', space=vmem, size = 0x1000, scoped, tag = 'output window, operand 0, single buffered']
    %29 = vsyncpa [#allocation3], 0
    %30 = vsyncpa [#allocation6], 0
    %31 = vsyncpa [#allocation9], 0
    %32 = vsyncpa [#allocation12], 0
    %33 = vsyncpa [#allocation15], 0
    %34 = vsyncpa [#allocation18], 0
    %35 = vsyncpa [#allocation21], 0
    %36 = vsyncpa [#allocation24], 0
    %37 = vsyncpa [#allocation27], 0
    %38 = vsyncpa [#allocation30], 0
    %39 = vsyncpa [#allocation4], 0
    // Predicated region
    $region2: #{tpu_custom_call.1} parent=1 // pred_check
      _
    $region3: #{tpu_custom_call.1} parent=1 // pred_check_branch
      %41 = sbr.rel (0) target = $region5
    $region4: #{tpu_custom_call.1} parent=1 // pred_region
      %s43 = ssub.s32 128, 128
      %44 = vsyncadd [#allocation3], %s43
      %s46 = sshll.u32 [#allocation2], 4
      %s47 = int_to_ptr.vmem [resolvable:$true] %s46
      %49 = dma.hbm_to_vmem [thread:$0]  %s0, 128, %s47, [#allocation3]
    $region5: #{tpu_custom_call.1} parent=1 // pred_fallthru
      _
    // Predicated region
    $region6: #{tpu_custom_call.1} parent=1 // pred_check
      _
    $region7: #{tpu_custom_call.1} parent=1 // pred_check_branch
      %51 = sbr.rel (0) target = $region9
    $region8: #{tpu_custom_call.1} parent=1 // pred_region
      %s53 = ssub.s32 128, 128
      %54 = vsyncadd [#allocation6], %s53
      %s56 = sshll.u32 [#allocation5], 4
      %s57 = int_to_ptr.vmem [resolvable:$true] %s56
      %59 = dma.hbm_to_vmem [thread:$0]  %s1, 128, %s57, [#allocation6]
    $region9: #{tpu_custom_call.1} parent=1 // pred_fallthru
      _
    // Predicated region
    $region10: #{tpu_custom_call.1} parent=1 // pred_check
      _
    $region11: #{tpu_custom_call.1} parent=1 // pred_check_branch
      %61 = sbr.rel (0) target = $region13
    $region12: #{tpu_custom_call.1} parent=1 // pred_region
      %s63 = ssub.s32 512, 512
      %64 = vsyncadd [#allocation6], %s63
      %s65 = sshll.u32 [#allocation7], 4
      %s66 = int_to_ptr.vmem [resolvable:$true] %s65
      %71 = dma.hbm_to_vmem [thread:$0]  %s2, 512, %s66, [#allocation6], 128, 128, 8
    $region13: #{tpu_custom_call.1} parent=1 // pred_fallthru
      _
    // Predicated region
    $region14: #{tpu_custom_call.1} parent=1 // pred_check
      _
    $region15: #{tpu_custom_call.1} parent=1 // pred_check_branch
      %73 = sbr.rel (0) target = $region17
    $region16: #{tpu_custom_call.1} parent=1 // pred_region
      %s75 = ssub.s32 16, 16
      %76 = vsyncadd [#allocation9], %s75
      %s78 = sshll.u32 [#allocation8], 4
      %s79 = int_to_ptr.vmem [resolvable:$true] %s78
      %81 = dma.hbm_to_vmem [thread:$0]  %s3, 16, %s79, [#allocation9]
    $region17: #{tpu_custom_call.1} parent=1 // pred_fallthru
      _
    // Predicated region
    $region18: #{tpu_custom_call.1} parent=1 // pred_check
      _
    $region19: #{tpu_custom_call.1} parent=1 // pred_check_branch
      %83 = sbr.rel (0) target = $region21
    $region20: #{tpu_custom_call.1} parent=1 // pred_region
      %s85 = ssub.s32 16, 16
      %86 = vsyncadd [#allocation9], %s85
      %s88 = sshll.u32 [#allocation10], 4
      %s89 = int_to_ptr.vmem [resolvable:$true] %s88
      %91 = dma.hbm_to_vmem [thread:$0]  %s4, 16, %s89, [#allocation9]
    $region21: #{tpu_custom_call.1} parent=1 // pred_fallthru
      _
    // Predicated region
    $region22: #{tpu_custom_call.1} parent=1 // pred_check
      _
    $region23: #{tpu_custom_call.1} parent=1 // pred_check_branch
      %93 = sbr.rel (0) target = $region25
    $region24: #{tpu_custom_call.1} parent=1 // pred_region
      %s95 = ssub.s32 16, 16
      %96 = vsyncadd [#allocation12], %s95
      %s98 = sshll.u32 [#allocation11], 4
      %s99 = int_to_ptr.vmem [resolvable:$true] %s98
      %101 = dma.hbm_to_vmem [thread:$0]  %s5, 16, %s99, [#allocation12]
    $region25: #{tpu_custom_call.1} parent=1 // pred_fallthru
      _
    // Predicated region
    $region26: #{tpu_custom_call.1} parent=1 // pred_check
      _
    $region27: #{tpu_custom_call.1} parent=1 // pred_check_branch
      %103 = sbr.rel (0) target = $region29
    $region28: #{tpu_custom_call.1} parent=1 // pred_region
      %s105 = ssub.s32 512, 512
      %106 = vsyncadd [#allocation12], %s105
      %s107 = sshll.u32 [#allocation13], 4
      %s108 = int_to_ptr.vmem [resolvable:$true] %s107
      %113 = dma.hbm_to_vmem [thread:$0]  %s6, 512, %s108, [#allocation12], 128, 128, 8
    $region29: #{tpu_custom_call.1} parent=1 // pred_fallthru
      _
    // Predicated region
    $region30: #{tpu_custom_call.1} parent=1 // pred_check
      _
    $region31: #{tpu_custom_call.1} parent=1 // pred_check_branch
      %115 = sbr.rel (0) target = $region33
    $region32: #{tpu_custom_call.1} parent=1 // pred_region
      %s117 = ssub.s32 16, 16
      %118 = vsyncadd [#allocation15], %s117
      %s120 = sshll.u32 [#allocation14], 4
      %s121 = int_to_ptr.vmem [resolvable:$true] %s120
      %123 = dma.hbm_to_vmem [thread:$0]  %s7, 16, %s121, [#allocation15]
    $region33: #{tpu_custom_call.1} parent=1 // pred_fallthru
      _
    // Predicated region
    $region34: #{tpu_custom_call.1} parent=1 // pred_check
      _
    $region35: #{tpu_custom_call.1} parent=1 // pred_check_branch
      %125 = sbr.rel (0) target = $region37
    $region36: #{tpu_custom_call.1} parent=1 // pred_region
      %s127 = ssub.s32 16, 16
      %128 = vsyncadd [#allocation15], %s127
      %s130 = sshll.u32 [#allocation16], 4
      %s131 = int_to_ptr.vmem [resolvable:$true] %s130
      %133 = dma.hbm_to_vmem [thread:$0]  %s8, 16, %s131, [#allocation15]
    $region37: #{tpu_custom_call.1} parent=1 // pred_fallthru
      _
    // Predicated region
    $region38: #{tpu_custom_call.1} parent=1 // pred_check
      _
    $region39: #{tpu_custom_call.1} parent=1 // pred_check_branch
      %135 = sbr.rel (0) target = $region41
    $region40: #{tpu_custom_call.1} parent=1 // pred_region
      %s137 = ssub.s32 16, 16
      %138 = vsyncadd [#allocation18], %s137
      %s140 = sshll.u32 [#allocation17], 4
      %s141 = int_to_ptr.vmem [resolvable:$true] %s140
      %143 = dma.hbm_to_vmem [thread:$0]  %s9, 16, %s141, [#allocation18]
    $region41: #{tpu_custom_call.1} parent=1 // pred_fallthru
      _
    // Predicated region
    $region42: #{tpu_custom_call.1} parent=1 // pred_check
      _
    $region43: #{tpu_custom_call.1} parent=1 // pred_check_branch
      %145 = sbr.rel (0) target = $region45
    $region44: #{tpu_custom_call.1} parent=1 // pred_region
      _
    $region45: #{tpu_custom_call.1} parent=1 // pred_fallthru
      _
    // Predicated region
    $region46: #{tpu_custom_call.1} parent=1 // pred_check
      _
    $region47: #{tpu_custom_call.1} parent=1 // pred_check_branch
      %147 = sbr.rel (0) target = $region49
    $region48: #{tpu_custom_call.1} parent=1 // pred_region
      %s149 = ssub.s32 16, 16
      %150 = vsyncadd [#allocation18], %s149
      %s152 = sshll.u32 [#allocation19], 4
      %s153 = int_to_ptr.vmem [resolvable:$true] %s152
      %155 = dma.hbm_to_vmem [thread:$0]  %s11, 16, %s153, [#allocation18]
    $region49: #{tpu_custom_call.1} parent=1 // pred_fallthru
      _
    // Predicated region
    $region50: #{tpu_custom_call.1} parent=1 // pred_check
      _
    $region51: #{tpu_custom_call.1} parent=1 // pred_check_branch
      %157 = sbr.rel (0) target = $region53
    $region52: #{tpu_custom_call.1} parent=1 // pred_region
      %s159 = ssub.s32 16, 16
      %160 = vsyncadd [#allocation21], %s159
      %s162 = sshll.u32 [#allocation20], 4
      %s163 = int_to_ptr.vmem [resolvable:$true] %s162
      %165 = dma.hbm_to_vmem [thread:$0]  %s12, 16, %s163, [#allocation21]
    $region53: #{tpu_custom_call.1} parent=1 // pred_fallthru
      _
    // Predicated region
    $region54: #{tpu_custom_call.1} parent=1 // pred_check
      _
    $region55: #{tpu_custom_call.1} parent=1 // pred_check_branch
      %167 = sbr.rel (0) target = $region57
    $region56: #{tpu_custom_call.1} parent=1 // pred_region
      %s169 = ssub.s32 16, 16
      %170 = vsyncadd [#allocation21], %s169
      %s172 = sshll.u32 [#allocation22], 4
      %s173 = int_to_ptr.vmem [resolvable:$true] %s172
      %175 = dma.hbm_to_vmem [thread:$0]  %s13, 16, %s173, [#allocation21]
    $region57: #{tpu_custom_call.1} parent=1 // pred_fallthru
      _
    // Predicated region
    $region58: #{tpu_custom_call.1} parent=1 // pred_check
      _
    $region59: #{tpu_custom_call.1} parent=1 // pred_check_branch
      %177 = sbr.rel (0) target = $region61
    $region60: #{tpu_custom_call.1} parent=1 // pred_region
      %s179 = ssub.s32 512, 512
      %180 = vsyncadd [#allocation24], %s179
      %s181 = sshll.u32 [#allocation23], 4
      %s182 = int_to_ptr.vmem [resolvable:$true] %s181
      %187 = dma.hbm_to_vmem [thread:$0]  %s14, 512, %s182, [#allocation24], 128, 128, 8
    $region61: #{tpu_custom_call.1} parent=1 // pred_fallthru
      _
    // Predicated region
    $region62: #{tpu_custom_call.1} parent=1 // pred_check
      _
    $region63: #{tpu_custom_call.1} parent=1 // pred_check_branch
      %189 = sbr.rel (0) target = $region65
    $region64: #{tpu_custom_call.1} parent=1 // pred_region
      %s191 = ssub.s32 16, 16
      %192 = vsyncadd [#allocation24], %s191
      %s194 = sshll.u32 [#allocation25], 4
      %s195 = int_to_ptr.vmem [resolvable:$true] %s194
      %197 = dma.hbm_to_vmem [thread:$0]  %s15, 16, %s195, [#allocation24]
    $region65: #{tpu_custom_call.1} parent=1 // pred_fallthru
      _
    // Predicated region
    $region66: #{tpu_custom_call.1} parent=1 // pred_check
      _
    $region67: #{tpu_custom_call.1} parent=1 // pred_check_branch
      %199 = sbr.rel (0) target = $region69
    $region68: #{tpu_custom_call.1} parent=1 // pred_region
      %s201 = ssub.s32 16, 16
      %202 = vsyncadd [#allocation27], %s201
      %s204 = sshll.u32 [#allocation26], 4
      %s205 = int_to_ptr.vmem [resolvable:$true] %s204
      %207 = dma.hbm_to_vmem [thread:$0]  %s16, 16, %s205, [#allocation27]
    $region69: #{tpu_custom_call.1} parent=1 // pred_fallthru
      _
    // Predicated region
    $region70: #{tpu_custom_call.1} parent=1 // pred_check
      _
    $region71: #{tpu_custom_call.1} parent=1 // pred_check_branch
      %209 = sbr.rel (0) target = $region73
    $region72: #{tpu_custom_call.1} parent=1 // pred_region
      %s211 = ssub.s32 16, 16
      %212 = vsyncadd [#allocation27], %s211
      %s214 = sshll.u32 [#allocation28], 4
      %s215 = int_to_ptr.vmem [resolvable:$true] %s214
      %217 = dma.hbm_to_vmem [thread:$0]  %s17, 16, %s215, [#allocation27]
    $region73: #{tpu_custom_call.1} parent=1 // pred_fallthru
      _
    // Predicated region
    $region74: #{tpu_custom_call.1} parent=1 // pred_check
      _
    $region75: #{tpu_custom_call.1} parent=1 // pred_check_branch
      %219 = sbr.rel (0) target = $region77
    $region76: #{tpu_custom_call.1} parent=1 // pred_region
      _
    $region77: #{tpu_custom_call.1} parent=1 // pred_fallthru
      _
    // Predicated region
    $region78: #{tpu_custom_call.1} parent=1 // pred_check
      _
    $region79: #{tpu_custom_call.1} parent=1 // pred_check_branch
      %221 = sbr.rel (0) target = $region81
    $region80: #{tpu_custom_call.1} parent=1 // pred_region
      _
    $region81: #{tpu_custom_call.1} parent=1 // pred_fallthru
      _
    // Predicated region
    $region82: #{tpu_custom_call.1} parent=1 // pred_check
      _
    $region83: #{tpu_custom_call.1} parent=1 // pred_check_branch
      %223 = sbr.rel (0) target = $region85
    $region84: #{tpu_custom_call.1} parent=1 // pred_region
      _
    $region85: #{tpu_custom_call.1} parent=1 // pred_fallthru
      _
    // Predicated region
    $region86: #{tpu_custom_call.1} parent=1 // pred_check
      _
    $region87: #{tpu_custom_call.1} parent=1 // pred_check_branch
      %225 = sbr.rel (0) target = $region89
    $region88: #{tpu_custom_call.1} parent=1 // pred_region
      _
    $region89: #{tpu_custom_call.1} parent=1 // pred_fallthru
      _
    // Predicated region
    $region90: #{tpu_custom_call.1} parent=1 // pred_check
      _
    $region91: #{tpu_custom_call.1} parent=1 // pred_check_branch
      %227 = sbr.rel (0) target = $region93
    $region92: #{tpu_custom_call.1} parent=1 // pred_region
      %s229 = ssub.s32 512, 512
      %230 = vsyncadd [#allocation30], %s229
      %s231 = sshll.u32 [#allocation29], 4
      %s232 = int_to_ptr.vmem [resolvable:$true] %s231
      %237 = dma.hbm_to_vmem [thread:$0]  %s22, 512, %s232, [#allocation30], 128, 128, 8
    $region93: #{tpu_custom_call.1} parent=1 // pred_fallthru
      _
    // Predicated region
    $region94: #{tpu_custom_call.1} parent=1 // pred_check
      _
    $region95: #{tpu_custom_call.1} parent=1 // pred_check_branch
      %239 = sbr.rel (0) target = $region97
    $region96: #{tpu_custom_call.1} parent=1 // pred_region
      _
    $region97: #{tpu_custom_call.1} parent=1 // pred_fallthru
      _
    // Predicated region
    $region98: #{tpu_custom_call.1} parent=1 // pred_check
      _
    $region99: #{tpu_custom_call.1} parent=1 // pred_check_branch
      %241 = sbr.rel (0) target = $region101
    $region100: #{tpu_custom_call.1} parent=1 // pred_region
      %242 = dma.done [#allocation3], 128
    $region101: #{tpu_custom_call.1} parent=1 // pred_fallthru
      _
    // Predicated region
    $region102: #{tpu_custom_call.1} parent=1 // pred_check
      _
    $region103: #{tpu_custom_call.1} parent=1 // pred_check_branch
      %244 = sbr.rel (0) target = $region105
    $region104: #{tpu_custom_call.1} parent=1 // pred_region
      %245 = dma.done [#allocation6], 128
    $region105: #{tpu_custom_call.1} parent=1 // pred_fallthru
      _
    // Predicated region
    $region106: #{tpu_custom_call.1} parent=1 // pred_check
      _
    $region107: #{tpu_custom_call.1} parent=1 // pred_check_branch
      %247 = sbr.rel (0) target = $region109
    $region108: #{tpu_custom_call.1} parent=1 // pred_region
      %248 = dma.done [#allocation6], 512
    $region109: #{tpu_custom_call.1} parent=1 // pred_fallthru
      _
    // Predicated region
    $region110: #{tpu_custom_call.1} parent=1 // pred_check
      _
    $region111: #{tpu_custom_call.1} parent=1 // pred_check_branch
      %250 = sbr.rel (0) target = $region113
    $region112: #{tpu_custom_call.1} parent=1 // pred_region
      %251 = dma.done [#allocation9], 16
    $region113: #{tpu_custom_call.1} parent=1 // pred_fallthru
      _
    // Predicated region
    $region114: #{tpu_custom_call.1} parent=1 // pred_check
      _
    $region115: #{tpu_custom_call.1} parent=1 // pred_check_branch
      %253 = sbr.rel (0) target = $region117
    $region116: #{tpu_custom_call.1} parent=1 // pred_region
      %254 = dma.done [#allocation9], 16
    $region117: #{tpu_custom_call.1} parent=1 // pred_fallthru
      _
    // Predicated region
    $region118: #{tpu_custom_call.1} parent=1 // pred_check
      _
    $region119: #{tpu_custom_call.1} parent=1 // pred_check_branch
      %256 = sbr.rel (0) target = $region121
    $region120: #{tpu_custom_call.1} parent=1 // pred_region
      %257 = dma.done [#allocation12], 16
    $region121: #{tpu_custom_call.1} parent=1 // pred_fallthru
      _
    // Predicated region
    $region122: #{tpu_custom_call.1} parent=1 // pred_check
      _
    $region123: #{tpu_custom_call.1} parent=1 // pred_check_branch
      %259 = sbr.rel (0) target = $region125
    $region124: #{tpu_custom_call.1} parent=1 // pred_region
      %260 = dma.done [#allocation12], 512
    $region125: #{tpu_custom_call.1} parent=1 // pred_fallthru
      _
    // Predicated region
    $region126: #{tpu_custom_call.1} parent=1 // pred_check
      _
    $region127: #{tpu_custom_call.1} parent=1 // pred_check_branch
      %262 = sbr.rel (0) target = $region129
    $region128: #{tpu_custom_call.1} parent=1 // pred_region
      %263 = dma.done [#allocation15], 16
    $region129: #{tpu_custom_call.1} parent=1 // pred_fallthru
      _
    // Predicated region
    $region130: #{tpu_custom_call.1} parent=1 // pred_check
      _
    $region131: #{tpu_custom_call.1} parent=1 // pred_check_branch
      %265 = sbr.rel (0) target = $region133
    $region132: #{tpu_custom_call.1} parent=1 // pred_region
      %266 = dma.done [#allocation15], 16
    $region133: #{tpu_custom_call.1} parent=1 // pred_fallthru
      _
    // Predicated region
    $region134: #{tpu_custom_call.1} parent=1 // pred_check
      _
    $region135: #{tpu_custom_call.1} parent=1 // pred_check_branch
      %268 = sbr.rel (0) target = $region137
    $region136: #{tpu_custom_call.1} parent=1 // pred_region
      %269 = dma.done [#allocation18], 16
    $region137: #{tpu_custom_call.1} parent=1 // pred_fallthru
      _
    // Predicated region
    $region138: #{tpu_custom_call.1} parent=1 // pred_check
      _
    $region139: #{tpu_custom_call.1} parent=1 // pred_check_branch
      %271 = sbr.rel (0) target = $region141
    $region140: #{tpu_custom_call.1} parent=1 // pred_region
      %272 = dma.done [#allocation18], 16
    $region141: #{tpu_custom_call.1} parent=1 // pred_fallthru
      _
    // Predicated region
    $region142: #{tpu_custom_call.1} parent=1 // pred_check
      _
    $region143: #{tpu_custom_call.1} parent=1 // pred_check_branch
      %274 = sbr.rel (0) target = $region145
    $region144: #{tpu_custom_call.1} parent=1 // pred_region
      %275 = dma.done [#allocation21], 16
    $region145: #{tpu_custom_call.1} parent=1 // pred_fallthru
      _
    // Predicated region
    $region146: #{tpu_custom_call.1} parent=1 // pred_check
      _
    $region147: #{tpu_custom_call.1} parent=1 // pred_check_branch
      %277 = sbr.rel (0) target = $region149
    $region148: #{tpu_custom_call.1} parent=1 // pred_region
      %278 = dma.done [#allocation21], 16
    $region149: #{tpu_custom_call.1} parent=1 // pred_fallthru
      _
    // Predicated region
    $region150: #{tpu_custom_call.1} parent=1 // pred_check
      _
    $region151: #{tpu_custom_call.1} parent=1 // pred_check_branch
      %280 = sbr.rel (0) target = $region153
    $region152: #{tpu_custom_call.1} parent=1 // pred_region
      %281 = dma.done [#allocation24], 512
    $region153: #{tpu_custom_call.1} parent=1 // pred_fallthru
      _
    // Predicated region
    $region154: #{tpu_custom_call.1} parent=1 // pred_check
      _
    $region155: #{tpu_custom_call.1} parent=1 // pred_check_branch
      %283 = sbr.rel (0) target = $region157
    $region156: #{tpu_custom_call.1} parent=1 // pred_region
      %284 = dma.done [#allocation24], 16
    $region157: #{tpu_custom_call.1} parent=1 // pred_fallthru
      _
    // Predicated region
    $region158: #{tpu_custom_call.1} parent=1 // pred_check
      _
    $region159: #{tpu_custom_call.1} parent=1 // pred_check_branch
      %286 = sbr.rel (0) target = $region161
    $region160: #{tpu_custom_call.1} parent=1 // pred_region
      %287 = dma.done [#allocation27], 16
    $region161: #{tpu_custom_call.1} parent=1 // pred_fallthru
      _
    // Predicated region
    $region162: #{tpu_custom_call.1} parent=1 // pred_check
      _
    $region163: #{tpu_custom_call.1} parent=1 // pred_check_branch
      %289 = sbr.rel (0) target = $region165
    $region164: #{tpu_custom_call.1} parent=1 // pred_region
      %290 = dma.done [#allocation27], 16
    $region165: #{tpu_custom_call.1} parent=1 // pred_fallthru
      _
    // Predicated region
    $region166: #{tpu_custom_call.1} parent=1 // pred_check
      _
    $region167: #{tpu_custom_call.1} parent=1 // pred_check_branch
      %292 = sbr.rel (0) target = $region169
    $region168: #{tpu_custom_call.1} parent=1 // pred_region
      %293 = dma.done [#allocation30], 512
    $region169: #{tpu_custom_call.1} parent=1 // pred_fallthru
      _
    %v294 = vld [vmem:[#allocation2] sm:$0xff]
    %v295 = vmul.f32 %v294, %v294
    %vm296 = vcmask 261120
    %v297 = vsel %vm296, %v295, 0.0
    %298 = vadd.xlane.f32.xlu0 %v297
    %v299 = vpop.xlane.xlu0 %298
    %v300 = vrsqrt.pop %v299
    %v301 = vmul.f32 %v294, %v300
    %v302 = vld [vmem:[#allocation5] sm:$0xff]
    %vm303 = vcmp.lt.s32.totalorder %v302, 1932735283
    %v304 = vsel %vm303, 1, 0
    %v305 = vcvt.s32.f32 %v304
    %v306 = vmul.f32 %v305, 1.1111112
    %v307 = vmul.f32 %v301, %v306
    %v308 = vld [vmem:[#allocation7] sm:$0xff]
    %v309 = vld [vmem:[#allocation7 + $0x8] sm:$0xff]
    %v310 = vld [vmem:[#allocation7 + $0x10] sm:$0xff]
    %v311 = vld [vmem:[#allocation7 + $0x18] sm:$0xff]
    %v312 = vld [vmem:[#allocation8] sm:$0x1]
    %v314 = vlaneseq
    %v315 = vshrl.u32 %v314, 7
    %v316 = vsub.s32 0, %v315
    %v317 = vrot.slane %v312, %v316
    %v320 = vsel %vm296, %v307, 0
    %322 = vmatprep.subr.mxu0 0.0
    %323 = vmatpush1.msra.mxu0 %v308
    %324 = vmatprep.subr.mxu0 0.0
    %325 = vmatpush1.msra.mxu0 %v309
    %326 = vmatprep.subr.mxu0 0.0
    %327 = vmatpush1.msra.mxu0 %v310
    %328 = vmatprep.subr.mxu0 0.0
    %329 = vmatpush1.msra.mxu0 %v311
    %330 = vmatprep.subr.mxu0 0.0
    %331 = vmatpush1.msra.mxu0 0.0
    %332 = vmatprep.subr.mxu0 0.0
    %333 = vmatpush1.msra.mxu0 0.0
    %334 = vmatprep.subr.mxu0 0.0
    %335 = vmatpush1.msra.mxu0 0.0
    %336 = vmatprep.subr.mxu0 0.0
    %337 = vmatpush1.msra.mxu0 0.0
    %338 = vmatprep.subr.mxu0 0.0
    %339 = vmatpush1.msra.mxu0 0.0
    %340 = vmatprep.subr.mxu0 0.0
    %341 = vmatpush1.msra.mxu0 0.0
    %342 = vmatprep.subr.mxu0 0.0
    %343 = vmatpush1.msra.mxu0 0.0
    %344 = vmatprep.subr.mxu0 0.0
    %345 = vmatpush1.msra.mxu0 0.0
    %346 = vmatprep.subr.mxu0 0.0
    %347 = vmatpush1.msra.mxu0 0.0
    %348 = vmatprep.subr.mxu0 0.0
    %349 = vmatpush1.msra.mxu0 0.0
    %350 = vmatprep.subr.mxu0 0.0
    %351 = vmatpush1.msra.mxu0 0.0
    %352 = vmatprep.subr.mxu0 0.0
    %353 = vmatpush1.msra.mxu0 0.0
    %354 = vmatprep.subr.mxu0 0.0
    %355 = vmatpush1.msra.mxu0 0.0
    %356 = vmatprep.subr.mxu0 0.0
    %357 = vmatpush1.msra.mxu0 0.0
    %358 = vmatprep.subr.mxu0 0.0
    %359 = vmatpush1.msra.mxu0 0.0
    %360 = vmatprep.subr.mxu0 0.0
    %361 = vmatpush1.msra.mxu0 0.0
    %362 = vmatprep.subr.mxu0 0.0
    %363 = vmatpush1.msra.mxu0 0.0
    %364 = vmatprep.subr.mxu0 0.0
    %365 = vmatpush1.msra.mxu0 0.0
    %366 = vmatprep.subr.mxu0 0.0
    %367 = vmatpush1.msra.mxu0 0.0
    %368 = vmatprep.subr.mxu0 0.0
    %369 = vmatpush1.msra.mxu0 0.0
    %370 = vmatprep.subr.mxu0 0.0
    %371 = vmatpush1.msra.mxu0 0.0
    %372 = vmatprep.subr.mxu0 0.0
    %373 = vmatpush1.msra.mxu0 0.0
    %374 = vmatprep.subr.mxu0 0.0
    %375 = vmatpush1.msra.mxu0 0.0
    %376 = vmatprep.subr.mxu0 0.0
    %377 = vmatpush1.msra.mxu0 0.0
    %378 = vmatprep.subr.mxu0 0.0
    %379 = vmatpush1.msra.mxu0 0.0
    %380 = vmatprep.subr.mxu0 0.0
    %381 = vmatpush1.msra.mxu0 0.0
    %382 = vmatprep.subr.mxu0 0.0
    %383 = vmatpush1.msra.mxu0 0.0
    %384 = vmatprep.subr.mxu0 0.0
    %385 = vmatpush1.msra.mxu0 0.0
    %386 = vmatprep.mubr.f32.mxu0 0.0
    %387 = vmatmul.mubr.f32.gmra.mrb[0].mxu0 %v320
    %v388 = vpop.f32.mrb[0].mxu0
    %v389 = vadd.f32 %v317, %v388
    %v390 = vpop.f32.mrb[0].mxu0
    %391 = vdwg.mxu0
    %v392 = vxor.u32 %v389, 2147483648
    %v393 = vmul.f32 %v392, 1.442695
    %v394 = vpow.pop %v393
    %v395 = vadd.f32 %v394, 1.0
    %v396 = vrcp.pop %v395
    %v397 = vmul.f32 1.0, %v396
    %v398 = vmul.f32 %v389, %v397
    %v399 = vld [vmem:[#allocation10] sm:$0x1]
    %v400 = vld [vmem:[#allocation11] sm:$0x1]
    %v401 = vsel %vm296, %v398, 0.0
    %402 = vadd.xlane.f32.xlu0 %v401
    %v403 = vpop.xlane.xlu0 %402
    %v404 = vrcp.pop 32.0
    %v405 = vmul.f32 %v403, %v404
    %v406 = vsub.f32 %v398, %v405
    %v407 = vmul.f32 %v406, %v406
    %v408 = vsel %vm296, %v407, 0.0
    %409 = vadd.xlane.f32.xlu0 %v408
    %v410 = vpop.xlane.xlu0 %409
    %v411 = vmul.f32 %v410, %v404
    %v412 = vadd.f32 %v411, 0.1
    %v413 = vrsqrt.pop %v412
    %v414 = vmul.f32 %v406, %v413
    %v416 = vlaneseq
    %v417 = vshrl.u32 %v416, 7
    %v418 = vsub.s32 0, %v417
    %v419 = vrot.slane %v399, %v418
    %v421 = vmul.f32 %v414, %v419
    %v423 = vlaneseq
    %v424 = vshrl.u32 %v423, 7
    %v425 = vsub.s32 0, %v424
    %v426 = vrot.slane %v400, %v425
    %v428 = vadd.f32 %v421, %v426
    %v429 = vld [vmem:[#allocation13] sm:$0xff]
    %v430 = vld [vmem:[#allocation13 + $0x8] sm:$0xff]
    %v431 = vld [vmem:[#allocation13 + $0x10] sm:$0xff]
    %v432 = vld [vmem:[#allocation13 + $0x18] sm:$0xff]
    %v433 = vld [vmem:[#allocation14] sm:$0x1]
    %v435 = vlaneseq
    %v436 = vshrl.u32 %v435, 7
    %v437 = vsub.s32 0, %v436
    %v438 = vrot.slane %v433, %v437
    %v441 = vsel %vm296, %v428, 0
    %443 = vmatprep.subr.mxu0 0.0
    %444 = vmatpush1.msra.mxu0 %v429
    %445 = vmatprep.subr.mxu0 0.0
    %446 = vmatpush1.msra.mxu0 %v430
    %447 = vmatprep.subr.mxu0 0.0
    %448 = vmatpush1.msra.mxu0 %v431
    %449 = vmatprep.subr.mxu0 0.0
    %450 = vmatpush1.msra.mxu0 %v432
    %451 = vmatprep.subr.mxu0 0.0
    %452 = vmatpush1.msra.mxu0 0.0
    %453 = vmatprep.subr.mxu0 0.0
    %454 = vmatpush1.msra.mxu0 0.0
    %455 = vmatprep.subr.mxu0 0.0
    %456 = vmatpush1.msra.mxu0 0.0
    %457 = vmatprep.subr.mxu0 0.0
    %458 = vmatpush1.msra.mxu0 0.0
    %459 = vmatprep.subr.mxu0 0.0
    %460 = vmatpush1.msra.mxu0 0.0
    %461 = vmatprep.subr.mxu0 0.0
    %462 = vmatpush1.msra.mxu0 0.0
    %463 = vmatprep.subr.mxu0 0.0
    %464 = vmatpush1.msra.mxu0 0.0
    %465 = vmatprep.subr.mxu0 0.0
    %466 = vmatpush1.msra.mxu0 0.0
    %467 = vmatprep.subr.mxu0 0.0
    %468 = vmatpush1.msra.mxu0 0.0
    %469 = vmatprep.subr.mxu0 0.0
    %470 = vmatpush1.msra.mxu0 0.0
    %471 = vmatprep.subr.mxu0 0.0
    %472 = vmatpush1.msra.mxu0 0.0
    %473 = vmatprep.subr.mxu0 0.0
    %474 = vmatpush1.msra.mxu0 0.0
    %475 = vmatprep.subr.mxu0 0.0
    %476 = vmatpush1.msra.mxu0 0.0
    %477 = vmatprep.subr.mxu0 0.0
    %478 = vmatpush1.msra.mxu0 0.0
    %479 = vmatprep.subr.mxu0 0.0
    %480 = vmatpush1.msra.mxu0 0.0
    %481 = vmatprep.subr.mxu0 0.0
    %482 = vmatpush1.msra.mxu0 0.0
    %483 = vmatprep.subr.mxu0 0.0
    %484 = vmatpush1.msra.mxu0 0.0
    %485 = vmatprep.subr.mxu0 0.0
    %486 = vmatpush1.msra.mxu0 0.0
    %487 = vmatprep.subr.mxu0 0.0
    %488 = vmatpush1.msra.mxu0 0.0
    %489 = vmatprep.subr.mxu0 0.0
    %490 = vmatpush1.msra.mxu0 0.0
    %491 = vmatprep.subr.mxu0 0.0
    %492 = vmatpush1.msra.mxu0 0.0
    %493 = vmatprep.subr.mxu0 0.0
    %494 = vmatpush1.msra.mxu0 0.0
    %495 = vmatprep.subr.mxu0 0.0
    %496 = vmatpush1.msra.mxu0 0.0
    %497 = vmatprep.subr.mxu0 0.0
    %498 = vmatpush1.msra.mxu0 0.0
    %499 = vmatprep.subr.mxu0 0.0
    %500 = vmatpush1.msra.mxu0 0.0
    %501 = vmatprep.subr.mxu0 0.0
    %502 = vmatpush1.msra.mxu0 0.0
    %503 = vmatprep.subr.mxu0 0.0
    %504 = vmatpush1.msra.mxu0 0.0
    %505 = vmatprep.subr.mxu0 0.0
    %506 = vmatpush1.msra.mxu0 0.0
    %507 = vmatprep.mubr.f32.mxu0 0.0
    %508 = vmatmul.mubr.f32.gmra.mrb[0].mxu0 %v441
    %v509 = vpop.f32.mrb[0].mxu0
    %v510 = vadd.f32 %v438, %v509
    %v511 = vpop.f32.mrb[0].mxu0
    %512 = vdwg.mxu0
    %v513 = vadd.f32 %v510, %v428
    %v514 = vxor.u32 %v513, 2147483648
    %v515 = vmul.f32 %v514, 1.442695
    %v516 = vpow.pop %v515
    %v517 = vadd.f32 %v516, 1.0
    %v518 = vrcp.pop %v517
    %v519 = vmul.f32 1.0, %v518
    %v520 = vmul.f32 %v513, %v519
    %v521 = vld [vmem:[#allocation16] sm:$0x1]
    %v522 = vld [vmem:[#allocation17] sm:$0x1]
    %v523 = vsel %vm296, %v520, 0.0
    %524 = vadd.xlane.f32.xlu0 %v523
    %v525 = vpop.xlane.xlu0 %524
    %v526 = vmul.f32 %v525, %v404
    %v527 = vsub.f32 %v520, %v526
    %v528 = vmul.f32 %v527, %v527
    %v529 = vsel %vm296, %v528, 0.0
    %530 = vadd.xlane.f32.xlu0 %v529
    %v531 = vpop.xlane.xlu0 %530
    %v532 = vmul.f32 %v531, %v404
    %v533 = vadd.f32 %v532, 0.1
    %v534 = vrsqrt.pop %v533
    %v535 = vmul.f32 %v527, %v534
    %v537 = vlaneseq
    %v538 = vshrl.u32 %v537, 7
    %v539 = vsub.s32 0, %v538
    %v540 = vrot.slane %v521, %v539
    %v542 = vmul.f32 %v535, %v540
    %v544 = vlaneseq
    %v545 = vshrl.u32 %v544, 7
    %v546 = vsub.s32 0, %v545
    %v547 = vrot.slane %v522, %v546
    %v549 = vadd.f32 %v542, %v547
    %v550 = vadd.f32 %v428, %v549
    %v551 = vld [vmem:[%s10] sm:$0xff]
    %v552 = vld [vmem:[%s10 + $0x8] sm:$0xff]
    %v553 = vld [vmem:[%s10 + $0x10] sm:$0xff]
    %v554 = vld [vmem:[%s10 + $0x18] sm:$0xff]
    %v555 = vld [vmem:[#allocation19] sm:$0x1]
    %v557 = vlaneseq
    %v558 = vshrl.u32 %v557, 7
    %v559 = vsub.s32 0, %v558
    %v560 = vrot.slane %v555, %v559
    %v563 = vsel %vm296, %v549, 0
    %565 = vmatprep.subr.mxu0 0.0
    %566 = vmatpush1.msra.mxu0 %v551
    %567 = vmatprep.subr.mxu0 0.0
    %568 = vmatpush1.msra.mxu0 %v552
    %569 = vmatprep.subr.mxu0 0.0
    %570 = vmatpush1.msra.mxu0 %v553
    %571 = vmatprep.subr.mxu0 0.0
    %572 = vmatpush1.msra.mxu0 %v554
    %573 = vmatprep.subr.mxu0 0.0
    %574 = vmatpush1.msra.mxu0 0.0
    %575 = vmatprep.subr.mxu0 0.0
    %576 = vmatpush1.msra.mxu0 0.0
    %577 = vmatprep.subr.mxu0 0.0
    %578 = vmatpush1.msra.mxu0 0.0
    %579 = vmatprep.subr.mxu0 0.0
    %580 = vmatpush1.msra.mxu0 0.0
    %581 = vmatprep.subr.mxu0 0.0
    %582 = vmatpush1.msra.mxu0 0.0
    %583 = vmatprep.subr.mxu0 0.0
    %584 = vmatpush1.msra.mxu0 0.0
    %585 = vmatprep.subr.mxu0 0.0
    %586 = vmatpush1.msra.mxu0 0.0
    %587 = vmatprep.subr.mxu0 0.0
    %588 = vmatpush1.msra.mxu0 0.0
    %589 = vmatprep.subr.mxu0 0.0
    %590 = vmatpush1.msra.mxu0 0.0
    %591 = vmatprep.subr.mxu0 0.0
    %592 = vmatpush1.msra.mxu0 0.0
    %593 = vmatprep.subr.mxu0 0.0
    %594 = vmatpush1.msra.mxu0 0.0
    %595 = vmatprep.subr.mxu0 0.0
    %596 = vmatpush1.msra.mxu0 0.0
    %597 = vmatprep.subr.mxu0 0.0
    %598 = vmatpush1.msra.mxu0 0.0
    %599 = vmatprep.subr.mxu0 0.0
    %600 = vmatpush1.msra.mxu0 0.0
    %601 = vmatprep.subr.mxu0 0.0
    %602 = vmatpush1.msra.mxu0 0.0
    %603 = vmatprep.subr.mxu0 0.0
    %604 = vmatpush1.msra.mxu0 0.0
    %605 = vmatprep.subr.mxu0 0.0
    %606 = vmatpush1.msra.mxu0 0.0
    %607 = vmatprep.subr.mxu0 0.0
    %608 = vmatpush1.msra.mxu0 0.0
    %609 = vmatprep.subr.mxu0 0.0
    %610 = vmatpush1.msra.mxu0 0.0
    %611 = vmatprep.subr.mxu0 0.0
    %612 = vmatpush1.msra.mxu0 0.0
    %613 = vmatprep.subr.mxu0 0.0
    %614 = vmatpush1.msra.mxu0 0.0
    %615 = vmatprep.subr.mxu0 0.0
    %616 = vmatpush1.msra.mxu0 0.0
    %617 = vmatprep.subr.mxu0 0.0
    %618 = vmatpush1.msra.mxu0 0.0
    %619 = vmatprep.subr.mxu0 0.0
    %620 = vmatpush1.msra.mxu0 0.0
    %621 = vmatprep.subr.mxu0 0.0
    %622 = vmatpush1.msra.mxu0 0.0
    %623 = vmatprep.subr.mxu0 0.0
    %624 = vmatpush1.msra.mxu0 0.0
    %625 = vmatprep.subr.mxu0 0.0
    %626 = vmatpush1.msra.mxu0 0.0
    %627 = vmatprep.subr.mxu0 0.0
    %628 = vmatpush1.msra.mxu0 0.0
    %629 = vmatprep.mubr.f32.mxu0 0.0
    %630 = vmatmul.mubr.f32.gmra.mrb[0].mxu0 %v563
    %v631 = vpop.f32.mrb[0].mxu0
    %v632 = vadd.f32 %v560, %v631
    %v633 = vpop.f32.mrb[0].mxu0
    %634 = vdwg.mxu0
    %v635 = vadd.f32 %v632, %v550
    %v636 = vxor.u32 %v635, 2147483648
    %v637 = vmul.f32 %v636, 1.442695
    %v638 = vpow.pop %v637
    %v639 = vadd.f32 %v638, 1.0
    %v640 = vrcp.pop %v639
    %v641 = vmul.f32 1.0, %v640
    %v642 = vmul.f32 %v635, %v641
    %v643 = vld [vmem:[#allocation20] sm:$0x1]
    %v644 = vld [vmem:[#allocation22] sm:$0x1]
    %v645 = vsel %vm296, %v642, 0.0
    %646 = vadd.xlane.f32.xlu0 %v645
    %v647 = vpop.xlane.xlu0 %646
    %v648 = vmul.f32 %v647, %v404
    %v649 = vsub.f32 %v642, %v648
    %v650 = vmul.f32 %v649, %v649
    %v651 = vsel %vm296, %v650, 0.0
    %652 = vadd.xlane.f32.xlu0 %v651
    %v653 = vpop.xlane.xlu0 %652
    %v654 = vmul.f32 %v653, %v404
    %v655 = vadd.f32 %v654, 0.1
    %v656 = vrsqrt.pop %v655
    %v657 = vmul.f32 %v649, %v656
    %v659 = vlaneseq
    %v660 = vshrl.u32 %v659, 7
    %v661 = vsub.s32 0, %v660
    %v662 = vrot.slane %v643, %v661
    %v664 = vmul.f32 %v657, %v662
    %v666 = vlaneseq
    %v667 = vshrl.u32 %v666, 7
    %v668 = vsub.s32 0, %v667
    %v669 = vrot.slane %v644, %v668
    %v671 = vadd.f32 %v664, %v669
    %v672 = vadd.f32 %v550, %v671
    %v673 = vld [vmem:[#allocation23] sm:$0xff]
    %v674 = vld [vmem:[#allocation23 + $0x8] sm:$0xff]
    %v675 = vld [vmem:[#allocation23 + $0x10] sm:$0xff]
    %v676 = vld [vmem:[#allocation23 + $0x18] sm:$0xff]
    %v677 = vld [vmem:[#allocation25] sm:$0x1]
    %v679 = vlaneseq
    %v680 = vshrl.u32 %v679, 7
    %v681 = vsub.s32 0, %v680
    %v682 = vrot.slane %v677, %v681
    %v685 = vsel %vm296, %v671, 0
    %687 = vmatprep.subr.mxu0 0.0
    %688 = vmatpush1.msra.mxu0 %v673
    %689 = vmatprep.subr.mxu0 0.0
    %690 = vmatpush1.msra.mxu0 %v674
    %691 = vmatprep.subr.mxu0 0.0
    %692 = vmatpush1.msra.mxu0 %v675
    %693 = vmatprep.subr.mxu0 0.0
    %694 = vmatpush1.msra.mxu0 %v676
    %695 = vmatprep.subr.mxu0 0.0
    %696 = vmatpush1.msra.mxu0 0.0
    %697 = vmatprep.subr.mxu0 0.0
    %698 = vmatpush1.msra.mxu0 0.0
    %699 = vmatprep.subr.mxu0 0.0
    %700 = vmatpush1.msra.mxu0 0.0
    %701 = vmatprep.subr.mxu0 0.0
    %702 = vmatpush1.msra.mxu0 0.0
    %703 = vmatprep.subr.mxu0 0.0
    %704 = vmatpush1.msra.mxu0 0.0
    %705 = vmatprep.subr.mxu0 0.0
    %706 = vmatpush1.msra.mxu0 0.0
    %707 = vmatprep.subr.mxu0 0.0
    %708 = vmatpush1.msra.mxu0 0.0
    %709 = vmatprep.subr.mxu0 0.0
    %710 = vmatpush1.msra.mxu0 0.0
    %711 = vmatprep.subr.mxu0 0.0
    %712 = vmatpush1.msra.mxu0 0.0
    %713 = vmatprep.subr.mxu0 0.0
    %714 = vmatpush1.msra.mxu0 0.0
    %715 = vmatprep.subr.mxu0 0.0
    %716 = vmatpush1.msra.mxu0 0.0
    %717 = vmatprep.subr.mxu0 0.0
    %718 = vmatpush1.msra.mxu0 0.0
    %719 = vmatprep.subr.mxu0 0.0
    %720 = vmatpush1.msra.mxu0 0.0
    %721 = vmatprep.subr.mxu0 0.0
    %722 = vmatpush1.msra.mxu0 0.0
    %723 = vmatprep.subr.mxu0 0.0
    %724 = vmatpush1.msra.mxu0 0.0
    %725 = vmatprep.subr.mxu0 0.0
    %726 = vmatpush1.msra.mxu0 0.0
    %727 = vmatprep.subr.mxu0 0.0
    %728 = vmatpush1.msra.mxu0 0.0
    %729 = vmatprep.subr.mxu0 0.0
    %730 = vmatpush1.msra.mxu0 0.0
    %731 = vmatprep.subr.mxu0 0.0
    %732 = vmatpush1.msra.mxu0 0.0
    %733 = vmatprep.subr.mxu0 0.0
    %734 = vmatpush1.msra.mxu0 0.0
    %735 = vmatprep.subr.mxu0 0.0
    %736 = vmatpush1.msra.mxu0 0.0
    %737 = vmatprep.subr.mxu0 0.0
    %738 = vmatpush1.msra.mxu0 0.0
    %739 = vmatprep.subr.mxu0 0.0
    %740 = vmatpush1.msra.mxu0 0.0
    %741 = vmatprep.subr.mxu0 0.0
    %742 = vmatpush1.msra.mxu0 0.0
    %743 = vmatprep.subr.mxu0 0.0
    %744 = vmatpush1.msra.mxu0 0.0
    %745 = vmatprep.subr.mxu0 0.0
    %746 = vmatpush1.msra.mxu0 0.0
    %747 = vmatprep.subr.mxu0 0.0
    %748 = vmatpush1.msra.mxu0 0.0
    %749 = vmatprep.subr.mxu0 0.0
    %750 = vmatpush1.msra.mxu0 0.0
    %751 = vmatprep.mubr.f32.mxu0 0.0
    %752 = vmatmul.mubr.f32.gmra.mrb[0].mxu0 %v685
    %v753 = vpop.f32.mrb[0].mxu0
    %v754 = vadd.f32 %v682, %v753
    %v755 = vpop.f32.mrb[0].mxu0
    %756 = vdwg.mxu0
    %v757 = vadd.f32 %v754, %v672
    %v758 = vxor.u32 %v757, 2147483648
    %v759 = vmul.f32 %v758, 1.442695
    %v760 = vpow.pop %v759
    %v761 = vadd.f32 %v760, 1.0
    %v762 = vrcp.pop %v761
    %v763 = vmul.f32 1.0, %v762
    %v764 = vmul.f32 %v757, %v763
    %v765 = vld [vmem:[#allocation26] sm:$0x1]
    %v766 = vld [vmem:[#allocation28] sm:$0x1]
    %v767 = vsel %vm296, %v764, 0.0
    %768 = vadd.xlane.f32.xlu0 %v767
    %v769 = vpop.xlane.xlu0 %768
    %v770 = vmul.f32 %v769, %v404
    %v771 = vsub.f32 %v764, %v770
    %v772 = vmul.f32 %v771, %v771
    %v773 = vsel %vm296, %v772, 0.0
    %774 = vadd.xlane.f32.xlu0 %v773
    %v775 = vpop.xlane.xlu0 %774
    %v776 = vmul.f32 %v775, %v404
    %v777 = vadd.f32 %v776, 0.1
    %v778 = vrsqrt.pop %v777
    %v779 = vmul.f32 %v771, %v778
    %v781 = vlaneseq
    %v782 = vshrl.u32 %v781, 7
    %v783 = vsub.s32 0, %v782
    %v784 = vrot.slane %v765, %v783
    %v786 = vmul.f32 %v779, %v784
    %v788 = vlaneseq
    %v789 = vshrl.u32 %v788, 7
    %v790 = vsub.s32 0, %v789
    %v791 = vrot.slane %v766, %v790
    %v793 = vadd.f32 %v786, %v791
    %v794 = vadd.f32 %v672, %v793
    %v795 = vld [vmem:[%s18] sm:$0xff]
    %v796 = vld [vmem:[%s18 + $0x8] sm:$0xff]
    %v797 = vld [vmem:[%s18 + $0x10] sm:$0xff]
    %v798 = vld [vmem:[%s18 + $0x18] sm:$0xff]
    %v799 = vld [vmem:[%s19] sm:$0x1]
    %v801 = vlaneseq
    %v802 = vshrl.u32 %v801, 7
    %v803 = vsub.s32 0, %v802
    %v804 = vrot.slane %v799, %v803
    %v807 = vsel %vm296, %v793, 0
    %809 = vmatprep.subr.mxu0 0.0
    %810 = vmatpush1.msra.mxu0 %v795
    %811 = vmatprep.subr.mxu0 0.0
    %812 = vmatpush1.msra.mxu0 %v796
    %813 = vmatprep.subr.mxu0 0.0
    %814 = vmatpush1.msra.mxu0 %v797
    %815 = vmatprep.subr.mxu0 0.0
    %816 = vmatpush1.msra.mxu0 %v798
    %817 = vmatprep.subr.mxu0 0.0
    %818 = vmatpush1.msra.mxu0 0.0
    %819 = vmatprep.subr.mxu0 0.0
    %820 = vmatpush1.msra.mxu0 0.0
    %821 = vmatprep.subr.mxu0 0.0
    %822 = vmatpush1.msra.mxu0 0.0
    %823 = vmatprep.subr.mxu0 0.0
    %824 = vmatpush1.msra.mxu0 0.0
    %825 = vmatprep.subr.mxu0 0.0
    %826 = vmatpush1.msra.mxu0 0.0
    %827 = vmatprep.subr.mxu0 0.0
    %828 = vmatpush1.msra.mxu0 0.0
    %829 = vmatprep.subr.mxu0 0.0
    %830 = vmatpush1.msra.mxu0 0.0
    %831 = vmatprep.subr.mxu0 0.0
    %832 = vmatpush1.msra.mxu0 0.0
    %833 = vmatprep.subr.mxu0 0.0
    %834 = vmatpush1.msra.mxu0 0.0
    %835 = vmatprep.subr.mxu0 0.0
    %836 = vmatpush1.msra.mxu0 0.0
    %837 = vmatprep.subr.mxu0 0.0
    %838 = vmatpush1.msra.mxu0 0.0
    %839 = vmatprep.subr.mxu0 0.0
    %840 = vmatpush1.msra.mxu0 0.0
    %841 = vmatprep.subr.mxu0 0.0
    %842 = vmatpush1.msra.mxu0 0.0
    %843 = vmatprep.subr.mxu0 0.0
    %844 = vmatpush1.msra.mxu0 0.0
    %845 = vmatprep.subr.mxu0 0.0
    %846 = vmatpush1.msra.mxu0 0.0
    %847 = vmatprep.subr.mxu0 0.0
    %848 = vmatpush1.msra.mxu0 0.0
    %849 = vmatprep.subr.mxu0 0.0
    %850 = vmatpush1.msra.mxu0 0.0
    %851 = vmatprep.subr.mxu0 0.0
    %852 = vmatpush1.msra.mxu0 0.0
    %853 = vmatprep.subr.mxu0 0.0
    %854 = vmatpush1.msra.mxu0 0.0
    %855 = vmatprep.subr.mxu0 0.0
    %856 = vmatpush1.msra.mxu0 0.0
    %857 = vmatprep.subr.mxu0 0.0
    %858 = vmatpush1.msra.mxu0 0.0
    %859 = vmatprep.subr.mxu0 0.0
    %860 = vmatpush1.msra.mxu0 0.0
    %861 = vmatprep.subr.mxu0 0.0
    %862 = vmatpush1.msra.mxu0 0.0
    %863 = vmatprep.subr.mxu0 0.0
    %864 = vmatpush1.msra.mxu0 0.0
    %865 = vmatprep.subr.mxu0 0.0
    %866 = vmatpush1.msra.mxu0 0.0
    %867 = vmatprep.subr.mxu0 0.0
    %868 = vmatpush1.msra.mxu0 0.0
    %869 = vmatprep.subr.mxu0 0.0
    %870 = vmatpush1.msra.mxu0 0.0
    %871 = vmatprep.subr.mxu0 0.0
    %872 = vmatpush1.msra.mxu0 0.0
    %873 = vmatprep.mubr.f32.mxu0 0.0
    %874 = vmatmul.mubr.f32.gmra.mrb[0].mxu0 %v807
    %v875 = vpop.f32.mrb[0].mxu0
    %v876 = vadd.f32 %v804, %v875
    %v877 = vpop.f32.mrb[0].mxu0
    %878 = vdwg.mxu0
    %v879 = vadd.f32 %v876, %v794
    %v880 = vxor.u32 %v879, 2147483648
    %v881 = vmul.f32 %v880, 1.442695
    %v882 = vpow.pop %v881
    %v883 = vadd.f32 %v882, 1.0
    %v884 = vrcp.pop %v883
    %v885 = vmul.f32 1.0, %v884
    %v886 = vmul.f32 %v879, %v885
    %v887 = vld [vmem:[%s20] sm:$0x1]
    %v888 = vld [vmem:[%s21] sm:$0x1]
    %v889 = vsel %vm296, %v886, 0.0
    %890 = vadd.xlane.f32.xlu0 %v889
    %v891 = vpop.xlane.xlu0 %890
    %v892 = vmul.f32 %v891, %v404
    %v893 = vsub.f32 %v886, %v892
    %v894 = vmul.f32 %v893, %v893
    %v895 = vsel %vm296, %v894, 0.0
    %896 = vadd.xlane.f32.xlu0 %v895
    %v897 = vpop.xlane.xlu0 %896
    %v898 = vmul.f32 %v897, %v404
    %v899 = vadd.f32 %v898, 0.1
    %v900 = vrsqrt.pop %v899
    %v901 = vmul.f32 %v893, %v900
    %v903 = vlaneseq
    %v904 = vshrl.u32 %v903, 7
    %v905 = vsub.s32 0, %v904
    %v906 = vrot.slane %v887, %v905
    %v908 = vmul.f32 %v901, %v906
    %v910 = vlaneseq
    %v911 = vshrl.u32 %v910, 7
    %v912 = vsub.s32 0, %v911
    %v913 = vrot.slane %v888, %v912
    %v915 = vadd.f32 %v908, %v913
    %v916 = vadd.f32 %v879, %v915
    %v917 = vxor.u32 %v916, 2147483648
    %v918 = vmul.f32 %v917, 1.442695
    %v919 = vpow.pop %v918
    %v920 = vadd.f32 %v919, 1.0
    %v921 = vrcp.pop %v920
    %v922 = vmul.f32 1.0, %v921
    %v923 = vmul.f32 %v916, %v922
    %v924 = vsel %vm296, %v923, 0.0
    %925 = vadd.xlane.f32.xlu0 %v924
    %v926 = vpop.xlane.xlu0 %925
    %v927 = vmul.f32 %v926, %v404
    %v928 = vsub.f32 %v923, %v927
    %v929 = vmul.f32 %v928, %v928
    %v930 = vsel %vm296, %v929, 0.0
    %931 = vadd.xlane.f32.xlu0 %v930
    %v932 = vpop.xlane.xlu0 %931
    %v933 = vmul.f32 %v932, %v404
    %v934 = vadd.f32 %v933, 0.1
    %v935 = vrsqrt.pop %v934
    %v936 = vmul.f32 %v928, %v935
    %v937 = vmul.f32 %v936, %v906
    %v938 = vadd.f32 %v937, %v913
    %v939 = vadd.f32 %v916, %v938
    %v940 = vxor.u32 %v939, 2147483648
    %v941 = vmul.f32 %v940, 1.442695
    %v942 = vpow.pop %v941
    %v943 = vadd.f32 %v942, 1.0
    %v944 = vrcp.pop %v943
    %v945 = vmul.f32 1.0, %v944
    %v946 = vmul.f32 %v939, %v945
    %v947 = vsel %vm296, %v946, 0.0
    %948 = vadd.xlane.f32.xlu0 %v947
    %v949 = vpop.xlane.xlu0 %948
    %v950 = vmul.f32 %v949, %v404
    %v951 = vsub.f32 %v946, %v950
    %v952 = vmul.f32 %v951, %v951
    %v953 = vsel %vm296, %v952, 0.0
    %954 = vadd.xlane.f32.xlu0 %v953
    %v955 = vpop.xlane.xlu0 %954
    %v956 = vmul.f32 %v955, %v404
    %v957 = vadd.f32 %v956, 0.1
    %v958 = vrsqrt.pop %v957
    %v959 = vmul.f32 %v951, %v958
    %v960 = vmul.f32 %v959, %v906
    %v961 = vadd.f32 %v960, %v913
    %v962 = vld [vmem:[#allocation29] sm:$0xff]
    %v963 = vld [vmem:[#allocation29 + $0x8] sm:$0xff]
    %v964 = vld [vmem:[#allocation29 + $0x10] sm:$0xff]
    %v965 = vld [vmem:[#allocation29 + $0x18] sm:$0xff]
    %v966 = vld [vmem:[%s23] sm:$0x1]
    %v968 = vlaneseq
    %v969 = vshrl.u32 %v968, 7
    %v970 = vsub.s32 0, %v969
    %v971 = vrot.slane %v966, %v970
    %v974 = vsel %vm296, %v961, 0
    %976 = vmatprep.subr.mxu0 0.0
    %977 = vmatpush1.msra.mxu0 %v962
    %978 = vmatprep.subr.mxu0 0.0
    %979 = vmatpush1.msra.mxu0 %v963
    %980 = vmatprep.subr.mxu0 0.0
    %981 = vmatpush1.msra.mxu0 %v964
    %982 = vmatprep.subr.mxu0 0.0
    %983 = vmatpush1.msra.mxu0 %v965
    %984 = vmatprep.subr.mxu0 0.0
    %985 = vmatpush1.msra.mxu0 0.0
    %986 = vmatprep.subr.mxu0 0.0
    %987 = vmatpush1.msra.mxu0 0.0
    %988 = vmatprep.subr.mxu0 0.0
    %989 = vmatpush1.msra.mxu0 0.0
    %990 = vmatprep.subr.mxu0 0.0
    %991 = vmatpush1.msra.mxu0 0.0
    %992 = vmatprep.subr.mxu0 0.0
    %993 = vmatpush1.msra.mxu0 0.0
    %994 = vmatprep.subr.mxu0 0.0
    %995 = vmatpush1.msra.mxu0 0.0
    %996 = vmatprep.subr.mxu0 0.0
    %997 = vmatpush1.msra.mxu0 0.0
    %998 = vmatprep.subr.mxu0 0.0
    %999 = vmatpush1.msra.mxu0 0.0
    %1000 = vmatprep.subr.mxu0 0.0
    %1001 = vmatpush1.msra.mxu0 0.0
    %1002 = vmatprep.subr.mxu0 0.0
    %1003 = vmatpush1.msra.mxu0 0.0
    %1004 = vmatprep.subr.mxu0 0.0
    %1005 = vmatpush1.msra.mxu0 0.0
    %1006 = vmatprep.subr.mxu0 0.0
    %1007 = vmatpush1.msra.mxu0 0.0
    %1008 = vmatprep.subr.mxu0 0.0
    %1009 = vmatpush1.msra.mxu0 0.0
    %1010 = vmatprep.subr.mxu0 0.0
    %1011 = vmatpush1.msra.mxu0 0.0
    %1012 = vmatprep.subr.mxu0 0.0
    %1013 = vmatpush1.msra.mxu0 0.0
    %1014 = vmatprep.subr.mxu0 0.0
    %1015 = vmatpush1.msra.mxu0 0.0
    %1016 = vmatprep.subr.mxu0 0.0
    %1017 = vmatpush1.msra.mxu0 0.0
    %1018 = vmatprep.subr.mxu0 0.0
    %1019 = vmatpush1.msra.mxu0 0.0
    %1020 = vmatprep.subr.mxu0 0.0
    %1021 = vmatpush1.msra.mxu0 0.0
    %1022 = vmatprep.subr.mxu0 0.0
    %1023 = vmatpush1.msra.mxu0 0.0
    %1024 = vmatprep.subr.mxu0 0.0
    %1025 = vmatpush1.msra.mxu0 0.0
    %1026 = vmatprep.subr.mxu0 0.0
    %1027 = vmatpush1.msra.mxu0 0.0
    %1028 = vmatprep.subr.mxu0 0.0
    %1029 = vmatpush1.msra.mxu0 0.0
    %1030 = vmatprep.subr.mxu0 0.0
    %1031 = vmatpush1.msra.mxu0 0.0
    %1032 = vmatprep.subr.mxu0 0.0
    %1033 = vmatpush1.msra.mxu0 0.0
    %1034 = vmatprep.subr.mxu0 0.0
    %1035 = vmatpush1.msra.mxu0 0.0
    %1036 = vmatprep.subr.mxu0 0.0
    %1037 = vmatpush1.msra.mxu0 0.0
    %1038 = vmatprep.subr.mxu0 0.0
    %1039 = vmatpush1.msra.mxu0 0.0
    %1040 = vmatprep.mubr.f32.mxu0 0.0
    %1041 = vmatmul.mubr.f32.gmra.mrb[0].mxu0 %v974
    %v1042 = vpop.f32.mrb[0].mxu0
    %v1043 = vadd.f32 %v971, %v1042
    %v1044 = vpop.f32.mrb[0].mxu0
    %1045 = vdwg.mxu0
    %1046 = vst.msk [vmem:[#allocation31] sm:$0xff] %vm296, %v1043
    // Predicated region
    $region170: #{tpu_custom_call.1} parent=1 // pred_check
      _
    $region171: #{tpu_custom_call.1} parent=1 // pred_check_branch
      %1048 = sbr.rel (0) target = $region173
    $region172: #{tpu_custom_call.1} parent=1 // pred_region
      %s1050 = ssub.s32 128, 128
      %1051 = vsyncadd [#allocation4], %s1050
      %s1053 = sshll.u32 [#allocation31], 4
      %s1054 = int_to_ptr.vmem [resolvable:$true] %s1053
      %1056 = dma.vmem_to_hbm [thread:$0]  %s1054, 128, %s24, [#allocation4]
    $region173: #{tpu_custom_call.1} parent=1 // pred_fallthru
      _
    // Predicated region
    $region174: #{tpu_custom_call.1} parent=1 // pred_check
      _
    $region175: #{tpu_custom_call.1} parent=1 // pred_check_branch
      %1058 = sbr.rel (0) target = $region177
    $region176: #{tpu_custom_call.1} parent=1 // pred_region
      %1059 = dma.done [#allocation4], 128
    $region177: #{tpu_custom_call.1} parent=1 // pred_fallthru
      _
    %1060 = vsyncpa [#allocation3], 1
    %1061 = vsyncpa [#allocation6], 1
    %1062 = vsyncpa [#allocation9], 1
    %1063 = vsyncpa [#allocation12], 1
    %1064 = vsyncpa [#allocation15], 1
    %1065 = vsyncpa [#allocation18], 1
    %1066 = vsyncpa [#allocation21], 1
    %1067 = vsyncpa [#allocation24], 1
    %1068 = vsyncpa [#allocation27], 1
    %1069 = vsyncpa [#allocation30], 1
    %1070 = vsyncpa [#allocation4], 1

</llo_original>
